<compile_context>
chip_gen: v7x
topology: tpu7x:2x2x1
jax: 0.10.0
libtpu: 0.0.40
codegen_flags: <defaults>
</compile_context>

<pallas_src>
import math
import jax
import jax.numpy as jnp
from jax.experimental import pallas as pl
from jax.experimental.pallas import tpu as pltpu

N_HEADS = 4
H = 128            # hidden_size[0]
I = 256            # inner_size[0]
D_HEAD = H // N_HEADS
LN_EPS = 1e-12


# ----------------------------- kernel helpers -----------------------------
def _mm(a, b):
    # bf16 x bf16 operands, f32 accumulation on the MXU.
    return jax.lax.dot_general(a, b, (((1,), (0,)), ((), ())),
                               preferred_element_type=jnp.float32)


def _layernorm(x, gamma, beta):
    mu = jnp.mean(x, axis=-1, keepdims=True)
    var = jnp.mean((x - mu) ** 2, axis=-1, keepdims=True)
    return (x - mu) * jax.lax.rsqrt(var + LN_EPS) * gamma + beta


def _gelu(x):  # exact erf gelu, matching the PyTorch module
    return x * 0.5 * (1.0 + jax.lax.erf(x / math.sqrt(2.0)))


def _elu(x):
    # PyTorch uses expm1; exp(x)-1 differs only by tiny rounding near 0-.
    return jnp.where(x > 0, x, jnp.exp(x) - 1.0)


# -------------------------------- kernel ----------------------------------
def feedforward_k1_kernel(
    x_ref, mask_ref, wcat_ref, wd_ref, w1_ref, wg1b_ref, w2_ref, wg2b_ref,
    bcat_ref, vecH_ref, vecI_ref,
    o_ref,
):
    TB, S, Hd = x_ref.shape
    rows = TB * S
    x = x_ref[...].reshape(rows, Hd)        # f32: residual / LayerNorm path
    xb = x.astype(jnp.bfloat16)             # bf16 MXU operand

    mask = mask_ref[...]                    # (H, H) bf16 block-diag head mask
    bcat = bcat_ref[...]                    # (1, 768) f32 fused-projection bias
    vh = vecH_ref[...]                      # (7, H)  packed per-feature vectors
    vi = vecI_ref[...]                      # (2, I)
    bd, ga, ba = vh[0:1], vh[1:2], vh[2:3]
    b2, bg2b = vh[3:4], vh[4:5]
    gf, bf = vh[5:6], vh[6:7]
    b1, bg1b = vi[0:1], vi[1:2]

    # ---- fused x-projection: [ q | k | v | gate1_pre | gate2_pre ] ----
    proj = _mm(xb, wcat_ref[...]) + bcat                     # (rows, 768) f32
    q = proj[:, 0:H]
    k = proj[:, H:2 * H]
    v = proj[:, 2 * H:3 * H]
    g1_pre = proj[:, 3 * H:3 * H + I]
    g2_pre = proj[:, 3 * H + I:3 * H + I + H]

    # ---- SP_MultiHeadAttention_ (normalized-ELU linear attention) ----
    eq = _elu(q)
    ek = _elu(k)
    # Per-head sum of squares broadcast to all lanes with ONE block-diagonal
    # mask matmul for q and k together (no 32-wide slices / lane shuffles).
    # NOTE: like the PyTorch module, an all-zero head row would give inf here.
    sq = jnp.concatenate([eq * eq, ek * ek], axis=0).astype(jnp.bfloat16)
    inv = jax.lax.rsqrt(_mm(sq, mask))                       # (2*rows, H) f32
    qn = (eq * inv[:rows]).astype(jnp.bfloat16)
    kn = (ek * inv[rows:]).astype(jnp.bfloat16)

    # Per-batch-element KV = kn^T @ v (contraction over sequence), all heads
    # fused full width; cross-head terms removed by the same mask.
    qn3 = qn.reshape(TB, S, Hd)
    kn3 = kn.reshape(TB, S, Hd)
    v3 = v.astype(jnp.bfloat16).reshape(TB, S, Hd)
    kv = jax.lax.dot_general(kn3, v3, (((1,), (1,)), ((0,), (0,))),
                             preferred_element_type=jnp.float32)  # (TB, H, H)
    kv = (kv * mask).astype(jnp.bfloat16)
    ctx3 = jax.lax.dot_general(qn3, kv, (((2,), (1,)), ((0,), (0,))),
                               preferred_element_type=jnp.float32)  # (TB, S, H)
    ctx = ctx3.reshape(rows, Hd).astype(jnp.bfloat16)

    # 1/sqrt(D_HEAD) is folded into wd in the wrapper.
    attn = _mm(ctx, wd_ref[...]) + bd
    hs = _layernorm(attn + x, ga, ba)        # attention LayerNorm (+ residual)

    # ---- FeedForward_ branch k == 1 (gates' "* 2" folded into w1/b1, w2/b2) --
    g1 = jax.nn.sigmoid(
        _mm(jnp.maximum(g1_pre, 0.0).astype(jnp.bfloat16), wg1b_ref[...])
        + bg1b)                                               # GateNN_ 1
    h1 = _gelu((_mm(hs.astype(jnp.bfloat16), w1_ref[...]) + b1) * g1)
    g2 = jax.nn.sigmoid(
        _mm(jnp.maximum(g2_pre, 0.0).astype(jnp.bfloat16), wg2b_ref[...])
        + bg2b)                                               # GateNN_ 2
    h2 = (_mm(h1.astype(jnp.bfloat16), w2_ref[...]) + b2) * g2
    # TODO(synk): dropout layers are identity here (inference / eval mode)
    out = _layernorm(h2 + x, gf, bf)
    o_ref[...] = out.reshape(TB, S, Hd)


# ------------------------------- wrapper -----------------------------------
def _vmem_estimate_bytes(tb, S):
    """Rough per-grid-step VMEM working-set estimate for block batch `tb`."""
    rows = tb * S
    io = 2 * 2 * rows * H * 4                                   # x/out, 2-deep, f32
    w = 2 * 2 * (H * 768 + H * H + H * I + I * I + I * H + 2 * H * H)  # bf16, 2 bufs
    live = rows * (768 * 4 + 12 * H * 4 + 4 * I * 4)            # proj + f32 temps
    kv = tb * H * H * (4 + 2)                                   # kv f32 + bf16 copy
    return io + w + live + kv


def _choose_block_batch(B, S, *, vmem_budget_bytes=28 << 20):
    """Largest divisor of B whose working set fits the budget (fewest steps).

    Prefers an even grid-step count when there is more than one step so both
    v7x TensorCores stay busy.
    """
    divs = [d for d in range(1, B + 1) if B % d == 0]
    fits = [d for d in divs if _vmem_estimate_bytes(d, S) <= vmem_budget_bytes]
    if not fits:
        # TODO(synk): S alone exceeds the VMEM budget; sequence tiling needed.
        fits = [1]
    tb = fits[-1]
    nsteps = B // tb
    if nsteps > 1 and nsteps % 2 == 1:
        even = [d for d in fits if (B // d) % 2 == 0]
        if even:
            tb = even[-1]
    return tb


def _const_spec(shape):
    nd = len(shape)
    return pl.BlockSpec(shape, lambda b, _nd=nd: (0,) * _nd)


def feedforward_k1(x, params, *, block_batch=None):
    B, S, Hd = x.shape
    assert Hd == H
    (wq, bq, wk, bk, wv, bv, wd, bd, ga, ba,
     w1, b1, wg1a, bg1a, wg1b, bg1b, w2, b2, wg2a, bg2a, wg2b, bg2b,
     gf, bf) = params

    f32, b16 = jnp.float32, jnp.bfloat16

    # Fused x-projection weight [query | key | value | gate_1.lin1 | gate_2.lin1].
    wcat = jnp.concatenate([wq, wk, wv, wg1a, wg2a], axis=1).astype(b16)  # (H,768)
    bcat = jnp.concatenate([bq, bk, bv, bg1a, bg2a])[None, :].astype(f32)  # (1,768)

    # One-time constant folding into weights:
    #   * attention 1/sqrt(D_HEAD) into `dense`
    #   * the gates' "* 2.0" into dense_1 / dense_2 (product is linear in them)
    wd_s = (wd * (1.0 / math.sqrt(D_HEAD))).astype(b16)
    w1_s, b1_s = (w1 * 2.0).astype(b16), (b1 * 2.0).astype(f32)
    w2_s, b2_s = (w2 * 2.0).astype(b16), (b2 * 2.0).astype(f32)

    # Pack remaining per-feature vectors (fewer BlockSpecs / DMA descriptors).
    vecH = jnp.stack([bd, ga, ba, b2_s, bg2b, gf, bf]).astype(f32)   # (7, H)
    vecI = jnp.stack([b1_s, bg1b]).astype(f32)                        # (2, I)

    # Block-diagonal head mask (1 where row and col belong to the same head).
    head_ids = jnp.arange(H, dtype=jnp.int32) // D_HEAD
    head_mask = (head_ids[:, None] == head_ids[None, :]).astype(b16)

    tb = _choose_block_batch(B, S) if block_batch is None else block_batch
    assert B % tb == 0
    grid = (B // tb,)

    consts = [head_mask, wcat, wd_s, w1_s, wg1b.astype(b16), w2_s,
              wg2b.astype(b16), bcat, vecH, vecI]

    in_specs = [pl.BlockSpec((tb, S, H), lambda b: (b, 0, 0))]
    in_specs += [_const_spec(c.shape) for c in consts]

    return pl.pallas_call(
        feedforward_k1_kernel,
        out_shape=jax.ShapeDtypeStruct((B, S, H), jnp.float32),
        grid=grid,
        in_specs=in_specs,
        out_specs=pl.BlockSpec((tb, S, H), lambda b: (b, 0, 0)),
        compiler_params=pltpu.CompilerParams(
            dimension_semantics=("parallel",),
            vmem_limit_bytes=48 * 1024 * 1024),
    )(x, *consts)


# --------------------------- pure-JAX reference -----------------------------
def reference(x, p):
    (wq, bq, wk, bk, wv, bv, wd, bd, ga, ba,
     w1, b1, wg1a, bg1a, wg1b, bg1b, w2, b2, wg2a, bg2a, wg2b, bg2b,
     gf, bf) = p
    B, S, _ = x.shape

    def ln(z, g, b_):
        mu = jnp.mean(z, -1, keepdims=True)
        var = jnp.mean((z - mu) ** 2, -1, keepdims=True)
        return (z - mu) / jnp.sqrt(var + LN_EPS) * g + b_

    q = (x @ wq + bq).reshape(B, S, N_HEADS, D_HEAD).transpose(0, 2, 1, 3)
    k = (x @ wk + bk).reshape(B, S, N_HEADS, D_HEAD).transpose(0, 2, 1, 3)
    v = (x @ wv + bv).reshape(B, S, N_HEADS, D_HEAD).transpose(0, 2, 1, 3)
    eq, ek = _elu(q), _elu(k)
    qn = eq / jnp.linalg.norm(eq, axis=-1, keepdims=True)
    kn = ek / jnp.linalg.norm(ek, axis=-1, keepdims=True)
    kv = jnp.einsum('bhsd,bhse->bhde', kn, v)
    ctx = jnp.einsum('bhsd,bhde->bhse', qn, kv) / math.sqrt(D_HEAD)
    ctx = ctx.transpose(0, 2, 1, 3).reshape(B, S, H)
    hs = ln(ctx @ wd + bd + x, ga, ba)

    g1 = jax.nn.sigmoid(jnp.maximum(x @ wg1a + bg1a, 0.0) @ wg1b + bg1b) * 2.0
    h1 = _gelu((hs @ w1 + b1) * g1)
    g2 = jax.nn.sigmoid(jnp.maximum(x @ wg2a + bg2a, 0.0) @ wg2b + bg2b) * 2.0
    h2 = (h1 @ w2 + b2) * g2
    return ln(h2 + x, gf, bf)


# --------------------------------- main -------------------------------------
if __name__ == "__main__":
    B, S = 2, 8
    key = jax.random.PRNGKey(0)
    ks = iter(jax.random.split(key, 40))

    def w(shape, scale=0.05):
        return jax.random.normal(next(ks), shape, jnp.float32) * scale

    params = [
        w((H, H)), w((H,)),            # query
        w((H, H)), w((H,)),            # key
        w((H, H)), w((H,)),            # value
        w((H, H)), w((H,)),            # attention dense
        jnp.ones((H,), jnp.float32), jnp.zeros((H,), jnp.float32),   # attn LN
        w((H, I)), w((I,)),            # dense_1
        w((H, I)), w((I,)),            # gate_1.lin1
        w((I, I)), w((I,)),            # gate_1.lin2
        w((I, H)), w((H,)),            # dense_2
        w((H, H)), w((H,)),            # gate_2.lin1
        w((H, H)), w((H,)),            # gate_2.lin2
        jnp.ones((H,), jnp.float32), jnp.zeros((H,), jnp.float32),   # FF LN
    ]

    x = jax.random.normal(next(ks), (B, S, H), jnp.float32)

    out = jax.block_until_ready(feedforward_k1(x, params))
    ref = jax.block_until_ready(reference(x, params))

    assert out.shape == (B, S, H)
    # bf16 MXU operands (same rounding TPU default matmul precision applies).
    assert jnp.allclose(out, ref, atol=1e-2, rtol=1e-2), \
        f"max abs err {jnp.max(jnp.abs(out - ref))}"
    print("KERNEL_OK")
</pallas_src>

<mosaic_0001>
module attributes {stable_mosaic.version = 11 : i64} {
  func.func @feedforward_k1_kernel(%arg0: i32, %arg1: memref<2x8x128xf32, #tpu.memory_space<vmem>>, %arg2: memref<128x128xbf16, #tpu.memory_space<vmem>>, %arg3: memref<128x768xbf16, #tpu.memory_space<vmem>>, %arg4: memref<128x128xbf16, #tpu.memory_space<vmem>>, %arg5: memref<128x256xbf16, #tpu.memory_space<vmem>>, %arg6: memref<256x256xbf16, #tpu.memory_space<vmem>>, %arg7: memref<256x128xbf16, #tpu.memory_space<vmem>>, %arg8: memref<128x128xbf16, #tpu.memory_space<vmem>>, %arg9: memref<1x768xf32, #tpu.memory_space<vmem>>, %arg10: memref<7x128xf32, #tpu.memory_space<vmem>>, %arg11: memref<2x256xf32, #tpu.memory_space<vmem>>, %arg12: memref<2x8x128xf32, #tpu.memory_space<vmem>>) attributes {dimension_semantics = [#tpu.dimension_semantics<parallel>], iteration_bounds = array<i64: 1>, scalar_prefetch = 0 : i64, scratch_operands = 0 : i64, tpu.core_type = #tpu.core_type<tc>, window_params = [{transform_indices = @transform_0, window_bounds = array<i64: 2, 8, 128>}, {pipeline_mode = #tpu.pipeline_mode<synchronous>, transform_indices = @transform_1, window_bounds = array<i64: 128, 128>}, {pipeline_mode = #tpu.pipeline_mode<synchronous>, transform_indices = @transform_2, window_bounds = array<i64: 128, 768>}, {pipeline_mode = #tpu.pipeline_mode<synchronous>, transform_indices = @transform_3, window_bounds = array<i64: 128, 128>}, {pipeline_mode = #tpu.pipeline_mode<synchronous>, transform_indices = @transform_4, window_bounds = array<i64: 128, 256>}, {pipeline_mode = #tpu.pipeline_mode<synchronous>, transform_indices = @transform_5, window_bounds = array<i64: 256, 256>}, {pipeline_mode = #tpu.pipeline_mode<synchronous>, transform_indices = @transform_6, window_bounds = array<i64: 256, 128>}, {pipeline_mode = #tpu.pipeline_mode<synchronous>, transform_indices = @transform_7, window_bounds = array<i64: 128, 128>}, {pipeline_mode = #tpu.pipeline_mode<synchronous>, transform_indices = @transform_8, window_bounds = array<i64: 1, 768>}, {pipeline_mode = #tpu.pipeline_mode<synchronous>, transform_indices = @transform_9, window_bounds = array<i64: 7, 128>}, {pipeline_mode = #tpu.pipeline_mode<synchronous>, transform_indices = @transform_10, window_bounds = array<i64: 2, 256>}, {transform_indices = @transform_11, window_bounds = array<i64: 2, 8, 128>}]} {
    %c0 = arith.constant 0 : index
    %c0_0 = arith.constant 0 : index
    %c0_1 = arith.constant 0 : index
    %0 = vector.load %arg1[%c0, %c0_0, %c0_1] : memref<2x8x128xf32, #tpu.memory_space<vmem>>, vector<2x8x128xf32>
    %1 = vector.shape_cast %0 : vector<2x8x128xf32> to vector<16x128xf32>
    %2 = arith.truncf %1 : vector<16x128xf32> to vector<16x128xbf16>
    %c0_2 = arith.constant 0 : index
    %c0_3 = arith.constant 0 : index
    %3 = vector.load %arg2[%c0_2, %c0_3] : memref<128x128xbf16, #tpu.memory_space<vmem>>, vector<128x128xbf16>
    %c0_4 = arith.constant 0 : index
    %c0_5 = arith.constant 0 : index
    %4 = vector.load %arg9[%c0_4, %c0_5] : memref<1x768xf32, #tpu.memory_space<vmem>>, vector<1x768xf32>
    %c0_6 = arith.constant 0 : index
    %c0_7 = arith.constant 0 : index
    %5 = vector.load %arg10[%c0_6, %c0_7] : memref<7x128xf32, #tpu.memory_space<vmem>>, vector<7x128xf32>
    %c0_8 = arith.constant 0 : index
    %c0_9 = arith.constant 0 : index
    %6 = vector.load %arg11[%c0_8, %c0_9] : memref<2x256xf32, #tpu.memory_space<vmem>>, vector<2x256xf32>
    %7 = vector.extract_strided_slice %5 {offsets = [0, 0], sizes = [1, 128], strides = [1, 1]} : vector<7x128xf32> to vector<1x128xf32>
    %8 = vector.extract_strided_slice %5 {offsets = [1, 0], sizes = [1, 128], strides = [1, 1]} : vector<7x128xf32> to vector<1x128xf32>
    %9 = vector.extract_strided_slice %5 {offsets = [2, 0], sizes = [1, 128], strides = [1, 1]} : vector<7x128xf32> to vector<1x128xf32>
    %10 = vector.extract_strided_slice %5 {offsets = [3, 0], sizes = [1, 128], strides = [1, 1]} : vector<7x128xf32> to vector<1x128xf32>
    %11 = vector.extract_strided_slice %5 {offsets = [4, 0], sizes = [1, 128], strides = [1, 1]} : vector<7x128xf32> to vector<1x128xf32>
    %12 = vector.extract_strided_slice %5 {offsets = [5, 0], sizes = [1, 128], strides = [1, 1]} : vector<7x128xf32> to vector<1x128xf32>
    %13 = vector.extract_strided_slice %5 {offsets = [6, 0], sizes = [1, 128], strides = [1, 1]} : vector<7x128xf32> to vector<1x128xf32>
    %14 = vector.extract_strided_slice %6 {offsets = [0, 0], sizes = [1, 256], strides = [1, 1]} : vector<2x256xf32> to vector<1x256xf32>
    %15 = vector.extract_strided_slice %6 {offsets = [1, 0], sizes = [1, 256], strides = [1, 1]} : vector<2x256xf32> to vector<1x256xf32>
    %c0_10 = arith.constant 0 : index
    %c0_11 = arith.constant 0 : index
    %16 = vector.load %arg3[%c0_10, %c0_11] : memref<128x768xbf16, #tpu.memory_space<vmem>>, vector<128x768xbf16>
    %cst = arith.constant dense<0.000000e+00> : vector<16x768xf32>
    %17 = tpu.matmul %2, %16, %cst {dimension_numbers = #tpu.dot_dimension_numbers<[1], [0], [0], [1], [0, 0, 1, 1], [], []>} : vector<16x128xbf16>, vector<128x768xbf16>, vector<16x768xf32> -> vector<16x768xf32>
    %18 = vector.broadcast %4 : vector<1x768xf32> to vector<16x768xf32>
    %19 = arith.addf %17, %18 : vector<16x768xf32>
    %20 = vector.extract_strided_slice %19 {offsets = [0, 0], sizes = [16, 128], strides = [1, 1]} : vector<16x768xf32> to vector<16x128xf32>
    %21 = vector.extract_strided_slice %19 {offsets = [0, 128], sizes = [16, 128], strides = [1, 1]} : vector<16x768xf32> to vector<16x128xf32>
    %22 = vector.extract_strided_slice %19 {offsets = [0, 256], sizes = [16, 128], strides = [1, 1]} : vector<16x768xf32> to vector<16x128xf32>
    %23 = vector.extract_strided_slice %19 {offsets = [0, 384], sizes = [16, 256], strides = [1, 1]} : vector<16x768xf32> to vector<16x256xf32>
    %24 = vector.extract_strided_slice %19 {offsets = [0, 640], sizes = [16, 128], strides = [1, 1]} : vector<16x768xf32> to vector<16x128xf32>
    %cst_12 = arith.constant 0.000000e+00 : f32
    %25 = vector.broadcast %cst_12 : f32 to vector<16x128xf32>
    %26 = arith.cmpf ogt, %20, %25 : vector<16x128xf32>
    %27 = math.exp %20 : vector<16x128xf32>
    %cst_13 = arith.constant 1.000000e+00 : f32
    %28 = vector.broadcast %cst_13 : f32 to vector<16x128xf32>
    %29 = arith.subf %27, %28 : vector<16x128xf32>
    %30 = arith.select %26, %20, %29 : vector<16x128xi1>, vector<16x128xf32>
    %cst_14 = arith.constant 0.000000e+00 : f32
    %31 = vector.broadcast %cst_14 : f32 to vector<16x128xf32>
    %32 = arith.cmpf ogt, %21, %31 : vector<16x128xf32>
    %33 = math.exp %21 : vector<16x128xf32>
    %cst_15 = arith.constant 1.000000e+00 : f32
    %34 = vector.broadcast %cst_15 : f32 to vector<16x128xf32>
    %35 = arith.subf %33, %34 : vector<16x128xf32>
    %36 = arith.select %32, %21, %35 : vector<16x128xi1>, vector<16x128xf32>
    %37 = arith.mulf %30, %30 : vector<16x128xf32>
    %38 = arith.mulf %36, %36 : vector<16x128xf32>
    %39 = tpu.concatenate %37, %38 in 0 : vector<16x128xf32>, vector<16x128xf32> -> vector<32x128xf32>
    %40 = arith.truncf %39 : vector<32x128xf32> to vector<32x128xbf16>
    %cst_16 = arith.constant dense<0.000000e+00> : vector<32x128xf32>
    %41 = tpu.matmul %40, %3, %cst_16 {dimension_numbers = #tpu.dot_dimension_numbers<[1], [0], [0], [1], [0, 0, 1, 1], [], []>} : vector<32x128xbf16>, vector<128x128xbf16>, vector<32x128xf32> -> vector<32x128xf32>
    %42 = math.rsqrt %41 : vector<32x128xf32>
    %43 = vector.extract_strided_slice %42 {offsets = [0, 0], sizes = [16, 128], strides = [1, 1]} : vector<32x128xf32> to vector<16x128xf32>
    %44 = arith.mulf %30, %43 : vector<16x128xf32>
    %45 = arith.truncf %44 : vector<16x128xf32> to vector<16x128xbf16>
    %46 = vector.extract_strided_slice %42 {offsets = [16, 0], sizes = [16, 128], strides = [1, 1]} : vector<32x128xf32> to vector<16x128xf32>
    %47 = arith.mulf %36, %46 : vector<16x128xf32>
    %48 = arith.truncf %47 : vector<16x128xf32> to vector<16x128xbf16>
    %49 = vector.shape_cast %45 : vector<16x128xbf16> to vector<2x8x128xbf16>
    %50 = vector.shape_cast %48 : vector<16x128xbf16> to vector<2x8x128xbf16>
    %51 = arith.truncf %22 : vector<16x128xf32> to vector<16x128xbf16>
    %52 = vector.shape_cast %51 : vector<16x128xbf16> to vector<2x8x128xbf16>
    %cst_17 = arith.constant dense<0.000000e+00> : vector<2x128x128xf32>
    %53 = tpu.matmul %50, %52, %cst_17 {dimension_numbers = #tpu.dot_dimension_numbers<[1], [1], [2], [2], [0, 0, 0, 2, 1, 2], [0], [0]>} : vector<2x8x128xbf16>, vector<2x8x128xbf16>, vector<2x128x128xf32> -> vector<2x128x128xf32>
    %54 = arith.extf %3 : vector<128x128xbf16> to vector<128x128xf32>
    %55 = vector.shape_cast %54 : vector<128x128xf32> to vector<1x128x128xf32>
    %56 = vector.broadcast %55 : vector<1x128x128xf32> to vector<2x128x128xf32>
    %57 = arith.mulf %53, %56 : vector<2x128x128xf32>
    %58 = arith.truncf %57 : vector<2x128x128xf32> to vector<2x128x128xbf16>
    %cst_18 = arith.constant dense<0.000000e+00> : vector<2x8x128xf32>
    %59 = tpu.matmul %49, %58, %cst_18 {dimension_numbers = #tpu.dot_dimension_numbers<[2], [1], [1], [2], [0, 0, 0, 1, 1, 2], [0], [0]>} : vector<2x8x128xbf16>, vector<2x128x128xbf16>, vector<2x8x128xf32> -> vector<2x8x128xf32>
    %60 = vector.shape_cast %59 : vector<2x8x128xf32> to vector<16x128xf32>
    %61 = arith.truncf %60 : vector<16x128xf32> to vector<16x128xbf16>
    %c0_19 = arith.constant 0 : index
    %c0_20 = arith.constant 0 : index
    %62 = vector.load %arg4[%c0_19, %c0_20] : memref<128x128xbf16, #tpu.memory_space<vmem>>, vector<128x128xbf16>
    %cst_21 = arith.constant dense<0.000000e+00> : vector<16x128xf32>
    %63 = tpu.matmul %61, %62, %cst_21 {dimension_numbers = #tpu.dot_dimension_numbers<[1], [0], [0], [1], [0, 0, 1, 1], [], []>} : vector<16x128xbf16>, vector<128x128xbf16>, vector<16x128xf32> -> vector<16x128xf32>
    %64 = vector.broadcast %7 : vector<1x128xf32> to vector<16x128xf32>
    %65 = arith.addf %63, %64 : vector<16x128xf32>
    %66 = arith.addf %65, %1 : vector<16x128xf32>
    %cst_22 = arith.constant dense<0.000000e+00> : vector<16xf32>
    %67 = vector.multi_reduction <add>, %66, %cst_22 [1] : vector<16x128xf32> to vector<16xf32>
    %68 = vector.shape_cast %67 : vector<16xf32> to vector<16x1xf32>
    %cst_23 = arith.constant 1.280000e+02 : f32
    %69 = vector.broadcast %cst_23 : f32 to vector<16x1xf32>
    %70 = arith.divf %68, %69 : vector<16x1xf32>
    %71 = vector.broadcast %70 : vector<16x1xf32> to vector<16x128xf32>
    %72 = arith.subf %66, %71 : vector<16x128xf32>
    %73 = arith.mulf %72, %72 : vector<16x128xf32>
    %cst_24 = arith.constant dense<0.000000e+00> : vector<16xf32>
    %74 = vector.multi_reduction <add>, %73, %cst_24 [1] : vector<16x128xf32> to vector<16xf32>
    %75 = vector.shape_cast %74 : vector<16xf32> to vector<16x1xf32>
    %cst_25 = arith.constant 1.280000e+02 : f32
    %76 = vector.broadcast %cst_25 : f32 to vector<16x1xf32>
    %77 = arith.divf %75, %76 : vector<16x1xf32>
    %78 = vector.broadcast %70 : vector<16x1xf32> to vector<16x128xf32>
    %79 = arith.subf %66, %78 : vector<16x128xf32>
    %cst_26 = arith.constant 9.99999996E-13 : f32
    %80 = vector.broadcast %cst_26 : f32 to vector<16x1xf32>
    %81 = arith.addf %77, %80 : vector<16x1xf32>
    %82 = math.rsqrt %81 : vector<16x1xf32>
    %83 = vector.broadcast %82 : vector<16x1xf32> to vector<16x128xf32>
    %84 = arith.mulf %79, %83 : vector<16x128xf32>
    %85 = vector.broadcast %8 : vector<1x128xf32> to vector<16x128xf32>
    %86 = arith.mulf %84, %85 : vector<16x128xf32>
    %87 = vector.broadcast %9 : vector<1x128xf32> to vector<16x128xf32>
    %88 = arith.addf %86, %87 : vector<16x128xf32>
    %cst_27 = arith.constant 0.000000e+00 : f32
    %89 = vector.broadcast %cst_27 : f32 to vector<16x256xf32>
    %90 = arith.maximumf %23, %89 : vector<16x256xf32>
    %91 = arith.truncf %90 : vector<16x256xf32> to vector<16x256xbf16>
    %c0_28 = arith.constant 0 : index
    %c0_29 = arith.constant 0 : index
    %92 = vector.load %arg6[%c0_28, %c0_29] : memref<256x256xbf16, #tpu.memory_space<vmem>>, vector<256x256xbf16>
    %cst_30 = arith.constant dense<0.000000e+00> : vector<16x256xf32>
    %93 = tpu.matmul %91, %92, %cst_30 {dimension_numbers = #tpu.dot_dimension_numbers<[1], [0], [0], [1], [0, 0, 1, 1], [], []>} : vector<16x256xbf16>, vector<256x256xbf16>, vector<16x256xf32> -> vector<16x256xf32>
    %94 = vector.broadcast %15 : vector<1x256xf32> to vector<16x256xf32>
    %95 = arith.addf %93, %94 : vector<16x256xf32>
    %96 = arith.negf %95 : vector<16x256xf32>
    %97 = math.exp %96 : vector<16x256xf32>
    %cst_31 = arith.constant 1.000000e+00 : f32
    %98 = vector.broadcast %cst_31 : f32 to vector<16x256xf32>
    %99 = arith.addf %98, %97 : vector<16x256xf32>
    %100 = arith.divf %98, %99 : vector<16x256xf32>
    %101 = arith.truncf %88 : vector<16x128xf32> to vector<16x128xbf16>
    %c0_32 = arith.constant 0 : index
    %c0_33 = arith.constant 0 : index
    %102 = vector.load %arg5[%c0_32, %c0_33] : memref<128x256xbf16, #tpu.memory_space<vmem>>, vector<128x256xbf16>
    %cst_34 = arith.constant dense<0.000000e+00> : vector<16x256xf32>
    %103 = tpu.matmul %101, %102, %cst_34 {dimension_numbers = #tpu.dot_dimension_numbers<[1], [0], [0], [1], [0, 0, 1, 1], [], []>} : vector<16x128xbf16>, vector<128x256xbf16>, vector<16x256xf32> -> vector<16x256xf32>
    %104 = vector.broadcast %14 : vector<1x256xf32> to vector<16x256xf32>
    %105 = arith.addf %103, %104 : vector<16x256xf32>
    %106 = arith.mulf %105, %100 : vector<16x256xf32>
    %cst_35 = arith.constant 5.000000e-01 : f32
    %107 = vector.broadcast %cst_35 : f32 to vector<16x256xf32>
    %108 = arith.mulf %106, %107 : vector<16x256xf32>
    %cst_36 = arith.constant 1.41421354 : f32
    %109 = vector.broadcast %cst_36 : f32 to vector<16x256xf32>
    %110 = arith.divf %106, %109 : vector<16x256xf32>
    %111 = math.erf %110 : vector<16x256xf32>
    %cst_37 = arith.constant 1.000000e+00 : f32
    %112 = vector.broadcast %cst_37 : f32 to vector<16x256xf32>
    %113 = arith.addf %112, %111 : vector<16x256xf32>
    %114 = arith.mulf %108, %113 : vector<16x256xf32>
    %cst_38 = arith.constant 0.000000e+00 : f32
    %115 = vector.broadcast %cst_38 : f32 to vector<16x128xf32>
    %116 = arith.maximumf %24, %115 : vector<16x128xf32>
    %117 = arith.truncf %116 : vector<16x128xf32> to vector<16x128xbf16>
    %c0_39 = arith.constant 0 : index
    %c0_40 = arith.constant 0 : index
    %118 = vector.load %arg8[%c0_39, %c0_40] : memref<128x128xbf16, #tpu.memory_space<vmem>>, vector<128x128xbf16>
    %cst_41 = arith.constant dense<0.000000e+00> : vector<16x128xf32>
    %119 = tpu.matmul %117, %118, %cst_41 {dimension_numbers = #tpu.dot_dimension_numbers<[1], [0], [0], [1], [0, 0, 1, 1], [], []>} : vector<16x128xbf16>, vector<128x128xbf16>, vector<16x128xf32> -> vector<16x128xf32>
    %120 = vector.broadcast %11 : vector<1x128xf32> to vector<16x128xf32>
    %121 = arith.addf %119, %120 : vector<16x128xf32>
    %122 = arith.negf %121 : vector<16x128xf32>
    %123 = math.exp %122 : vector<16x128xf32>
    %cst_42 = arith.constant 1.000000e+00 : f32
    %124 = vector.broadcast %cst_42 : f32 to vector<16x128xf32>
    %125 = arith.addf %124, %123 : vector<16x128xf32>
    %126 = arith.divf %124, %125 : vector<16x128xf32>
    %127 = arith.truncf %114 : vector<16x256xf32> to vector<16x256xbf16>
    %c0_43 = arith.constant 0 : index
    %c0_44 = arith.constant 0 : index
    %128 = vector.load %arg7[%c0_43, %c0_44] : memref<256x128xbf16, #tpu.memory_space<vmem>>, vector<256x128xbf16>
    %cst_45 = arith.constant dense<0.000000e+00> : vector<16x128xf32>
    %129 = tpu.matmul %127, %128, %cst_45 {dimension_numbers = #tpu.dot_dimension_numbers<[1], [0], [0], [1], [0, 0, 1, 1], [], []>} : vector<16x256xbf16>, vector<256x128xbf16>, vector<16x128xf32> -> vector<16x128xf32>
    %130 = vector.broadcast %10 : vector<1x128xf32> to vector<16x128xf32>
    %131 = arith.addf %129, %130 : vector<16x128xf32>
    %132 = arith.mulf %131, %126 : vector<16x128xf32>
    %133 = arith.addf %132, %1 : vector<16x128xf32>
    %cst_46 = arith.constant dense<0.000000e+00> : vector<16xf32>
    %134 = vector.multi_reduction <add>, %133, %cst_46 [1] : vector<16x128xf32> to vector<16xf32>
    %135 = vector.shape_cast %134 : vector<16xf32> to vector<16x1xf32>
    %cst_47 = arith.constant 1.280000e+02 : f32
    %136 = vector.broadcast %cst_47 : f32 to vector<16x1xf32>
    %137 = arith.divf %135, %136 : vector<16x1xf32>
    %138 = vector.broadcast %137 : vector<16x1xf32> to vector<16x128xf32>
    %139 = arith.subf %133, %138 : vector<16x128xf32>
    %140 = arith.mulf %139, %139 : vector<16x128xf32>
    %cst_48 = arith.constant dense<0.000000e+00> : vector<16xf32>
    %141 = vector.multi_reduction <add>, %140, %cst_48 [1] : vector<16x128xf32> to vector<16xf32>
    %142 = vector.shape_cast %141 : vector<16xf32> to vector<16x1xf32>
    %cst_49 = arith.constant 1.280000e+02 : f32
    %143 = vector.broadcast %cst_49 : f32 to vector<16x1xf32>
    %144 = arith.divf %142, %143 : vector<16x1xf32>
    %145 = vector.broadcast %137 : vector<16x1xf32> to vector<16x128xf32>
    %146 = arith.subf %133, %145 : vector<16x128xf32>
    %cst_50 = arith.constant 9.99999996E-13 : f32
    %147 = vector.broadcast %cst_50 : f32 to vector<16x1xf32>
    %148 = arith.addf %144, %147 : vector<16x1xf32>
    %149 = math.rsqrt %148 : vector<16x1xf32>
    %150 = vector.broadcast %149 : vector<16x1xf32> to vector<16x128xf32>
    %151 = arith.mulf %146, %150 : vector<16x128xf32>
    %152 = vector.broadcast %12 : vector<1x128xf32> to vector<16x128xf32>
    %153 = arith.mulf %151, %152 : vector<16x128xf32>
    %154 = vector.broadcast %13 : vector<1x128xf32> to vector<16x128xf32>
    %155 = arith.addf %153, %154 : vector<16x128xf32>
    %156 = vector.shape_cast %155 : vector<16x128xf32> to vector<2x8x128xf32>
    %c0_51 = arith.constant 0 : index
    %c0_52 = arith.constant 0 : index
    %c0_53 = arith.constant 0 : index
    %157 = vector.load %arg12[%c0_51, %c0_52, %c0_53] : memref<2x8x128xf32, #tpu.memory_space<vmem>>, vector<2x8x128xf32>
    tpu.vector_store %arg12[%c0_51, %c0_52, %c0_53], %156 {strides = array<i32>} : memref<2x8x128xf32, #tpu.memory_space<vmem>>, vector<2x8x128xf32>,
    return
  }
  func.func @transform_0(%arg0: i32) -> (i32, i32, i32) {
    %c0_i32 = arith.constant 0 : i32
    %c0_i32_0 = arith.constant 0 : i32
    %c0_i32_1 = arith.constant 0 : i32
    return %arg0, %c0_i32, %c0_i32_0 : i32, i32, i32
  }
  func.func @transform_1(%arg0: i32) -> (i32, i32) {
    %c0_i32 = arith.constant 0 : i32
    %c0_i32_0 = arith.constant 0 : i32
    %c0_i32_1 = arith.constant 0 : i32
    return %c0_i32, %c0_i32_0 : i32, i32
  }
  func.func @transform_2(%arg0: i32) -> (i32, i32) {
    %c0_i32 = arith.constant 0 : i32
    %c0_i32_0 = arith.constant 0 : i32
    %c0_i32_1 = arith.constant 0 : i32
    return %c0_i32, %c0_i32_0 : i32, i32
  }
  func.func @transform_3(%arg0: i32) -> (i32, i32) {
    %c0_i32 = arith.constant 0 : i32
    %c0_i32_0 = arith.constant 0 : i32
    %c0_i32_1 = arith.constant 0 : i32
    return %c0_i32, %c0_i32_0 : i32, i32
  }
  func.func @transform_4(%arg0: i32) -> (i32, i32) {
    %c0_i32 = arith.constant 0 : i32
    %c0_i32_0 = arith.constant 0 : i32
    %c0_i32_1 = arith.constant 0 : i32
    return %c0_i32, %c0_i32_0 : i32, i32
  }
  func.func @transform_5(%arg0: i32) -> (i32, i32) {
    %c0_i32 = arith.constant 0 : i32
    %c0_i32_0 = arith.constant 0 : i32
    %c0_i32_1 = arith.constant 0 : i32
    return %c0_i32, %c0_i32_0 : i32, i32
  }
  func.func @transform_6(%arg0: i32) -> (i32, i32) {
    %c0_i32 = arith.constant 0 : i32
    %c0_i32_0 = arith.constant 0 : i32
    %c0_i32_1 = arith.constant 0 : i32
    return %c0_i32, %c0_i32_0 : i32, i32
  }
  func.func @transform_7(%arg0: i32) -> (i32, i32) {
    %c0_i32 = arith.constant 0 : i32
    %c0_i32_0 = arith.constant 0 : i32
    %c0_i32_1 = arith.constant 0 : i32
    return %c0_i32, %c0_i32_0 : i32, i32
  }
  func.func @transform_8(%arg0: i32) -> (i32, i32) {
    %c0_i32 = arith.constant 0 : i32
    %c0_i32_0 = arith.constant 0 : i32
    %c0_i32_1 = arith.constant 0 : i32
    return %c0_i32, %c0_i32_0 : i32, i32
  }
  func.func @transform_9(%arg0: i32) -> (i32, i32) {
    %c0_i32 = arith.constant 0 : i32
    %c0_i32_0 = arith.constant 0 : i32
    %c0_i32_1 = arith.constant 0 : i32
    return %c0_i32, %c0_i32_0 : i32, i32
  }
  func.func @transform_10(%arg0: i32) -> (i32, i32) {
    %c0_i32 = arith.constant 0 : i32
    %c0_i32_0 = arith.constant 0 : i32
    %c0_i32_1 = arith.constant 0 : i32
    return %c0_i32, %c0_i32_0 : i32, i32
  }
  func.func @transform_11(%arg0: i32) -> (i32, i32, i32) {
    %c0_i32 = arith.constant 0 : i32
    %c0_i32_0 = arith.constant 0 : i32
    %c0_i32_1 = arith.constant 0 : i32
    return %arg0, %c0_i32, %c0_i32_0 : i32, i32, i32
  }
}

</mosaic_0001>

<llo_original>
// kernel: tpu_custom_call.1
$region0: #{tpu_custom_call.1}
  #allocation0 [shape = 'u32[]', space=smem, size = 0x4, offset = 0x4, fixed_abs, tag = 'smem constant byte address 0x4 - core index']
  #allocation1 [shape = 'u32[144,128]{1,0:T(1,128)}', space=vmem, size = 0x12000, scoped, tag = 'internal scratch']
  %s0 = inlined_call_operand.hbm [shape: f32[2,8,128], index: 0, kind: input, shape index: {}]
  %s1 = inlined_call_operand.hbm [shape: bf16[128,128], index: 1, kind: input, shape index: {}]
  %s2 = inlined_call_operand.hbm [shape: bf16[128,768], index: 2, kind: input, shape index: {}]
  %s3 = inlined_call_operand.hbm [shape: bf16[128,128], index: 3, kind: input, shape index: {}]
  %s4 = inlined_call_operand.hbm [shape: bf16[128,256], index: 4, kind: input, shape index: {}]
  %s5 = inlined_call_operand.hbm [shape: bf16[256,256], index: 5, kind: input, shape index: {}]
  %s6 = inlined_call_operand.hbm [shape: bf16[256,128], index: 6, kind: input, shape index: {}]
  %s7 = inlined_call_operand.hbm [shape: bf16[128,128], index: 7, kind: input, shape index: {}]
  %s8 = inlined_call_operand.vmem [shape: f32[1,768], index: 8, kind: input, shape index: {}]
  %s9 = inlined_call_operand.vmem [shape: f32[7,128], index: 9, kind: input, shape index: {}]
  %s10 = inlined_call_operand.vmem [shape: f32[2,256], index: 10, kind: input, shape index: {}]
  %s11 = inlined_call_operand.hbm [shape: f32[2,8,128], index: 11, kind: output, shape index: {}]
  %s12 = sld [smem:[#allocation0]]
  $region86: #{tpu_custom_call.1} parent=0
    _
  %s14 = ssub.s32 1, %s12
  %s15 = scalar_select 0, %s14, %s12
  $region1: #{tpu_custom_call.1} parent=0
    #allocation2 [shape = 'u8[8192]{0}', space=vmem, size = 0x2000, scoped, tag = 'input window, operand 0, single buffered']
    #allocation3 [shape = 's32[1]{0}', space=sflag, size = 0x4, scoped, tag = 'scoped memory for tpu_custom_call.1']
    #allocation4 [shape = 's32[1]{0}', space=sflag, size = 0x4, scoped, tag = 'scoped memory for tpu_custom_call.1']
    #allocation5 [shape = 'u8[32768]{0}', space=vmem, size = 0x8000, scoped, tag = 'input window, operand 1, single buffered']
    #allocation6 [shape = 's32[1]{0}', space=sflag, size = 0x4, scoped, tag = 'scoped memory for tpu_custom_call.1']
    #allocation7 [shape = 'u8[196608]{0}', space=vmem, size = 0x30000, scoped, tag = 'input window, operand 2, single buffered']
    #allocation8 [shape = 'u8[32768]{0}', space=vmem, size = 0x8000, scoped, tag = 'input window, operand 3, single buffered']
    #allocation9 [shape = 's32[1]{0}', space=sflag, size = 0x4, scoped, tag = 'scoped memory for tpu_custom_call.1']
    #allocation10 [shape = 'u8[65536]{0}', space=vmem, size = 0x10000, scoped, tag = 'input window, operand 4, single buffered']
    #allocation11 [shape = 'u8[131072]{0}', space=vmem, size = 0x20000, scoped, tag = 'input window, operand 5, single buffered']
    #allocation12 [shape = 's32[1]{0}', space=sflag, size = 0x4, scoped, tag = 'scoped memory for tpu_custom_call.1']
    #allocation13 [shape = 'u8[65536]{0}', space=vmem, size = 0x10000, scoped, tag = 'input window, operand 6, single buffered']
    #allocation14 [shape = 'u8[32768]{0}', space=vmem, size = 0x8000, scoped, tag = 'input window, operand 7, single buffered']
    #allocation15 [shape = 's32[1]{0}', space=sflag, size = 0x4, scoped, tag = 'scoped memory for tpu_custom_call.1']
    #allocation16 [shape = 'u8[8192]{0}', space=vmem, size = 0x2000, scoped, tag = 'output window, operand 0, single buffered']
    %16 = vsyncpa [#allocation3], 0
    %17 = vsyncpa [#allocation6], 0
    %18 = vsyncpa [#allocation9], 0
    %19 = vsyncpa [#allocation12], 0
    %20 = vsyncpa [#allocation15], 0
    %21 = vsyncpa [#allocation4], 0
    // Predicated region
    $region2: #{tpu_custom_call.1} parent=1 // pred_check
      _
    $region3: #{tpu_custom_call.1} parent=1 // pred_check_branch
      %23 = sbr.rel (0) target = $region5
    $region4: #{tpu_custom_call.1} parent=1 // pred_region
      %s25 = ssub.s32 256, 256
      %26 = vsyncadd [#allocation3], %s25
      %s27 = sshll.u32 [#allocation2], 4
      %s28 = int_to_ptr.vmem [resolvable:$true] %s27
      %33 = dma.hbm_to_vmem [thread:$0]  %s0, 256, %s28, [#allocation3], 128, 128, 8
    $region5: #{tpu_custom_call.1} parent=1 // pred_fallthru
      _
    // Predicated region
    $region6: #{tpu_custom_call.1} parent=1 // pred_check
      _
    $region7: #{tpu_custom_call.1} parent=1 // pred_check_branch
      %35 = sbr.rel (0) target = $region9
    $region8: #{tpu_custom_call.1} parent=1 // pred_region
      %s37 = ssub.s32 1024, 1024
      %38 = vsyncadd [#allocation6], %s37
      %s39 = sshll.u32 [#allocation5], 4
      %s40 = int_to_ptr.vmem [resolvable:$true] %s39
      %45 = dma.hbm_to_vmem [thread:$0]  %s1, 1024, %s40, [#allocation6], 64, 64, 4
    $region9: #{tpu_custom_call.1} parent=1 // pred_fallthru
      _
    // Predicated region
    $region10: #{tpu_custom_call.1} parent=1 // pred_check
      _
    $region11: #{tpu_custom_call.1} parent=1 // pred_check_branch
      %47 = sbr.rel (0) target = $region13
    $region12: #{tpu_custom_call.1} parent=1 // pred_region
      %s49 = ssub.s32 6144, 6144
      %50 = vsyncadd [#allocation6], %s49
      %s51 = sshll.u32 [#allocation7], 4
      %s52 = int_to_ptr.vmem [resolvable:$true] %s51
      %57 = dma.hbm_to_vmem [thread:$0]  %s2, 6144, %s52, [#allocation6], 384, 384, 24
    $region13: #{tpu_custom_call.1} parent=1 // pred_fallthru
      _
    // Predicated region
    $region14: #{tpu_custom_call.1} parent=1 // pred_check
      _
    $region15: #{tpu_custom_call.1} parent=1 // pred_check_branch
      %59 = sbr.rel (0) target = $region17
    $region16: #{tpu_custom_call.1} parent=1 // pred_region
      %s61 = ssub.s32 1024, 1024
      %62 = vsyncadd [#allocation9], %s61
      %s63 = sshll.u32 [#allocation8], 4
      %s64 = int_to_ptr.vmem [resolvable:$true] %s63
      %69 = dma.hbm_to_vmem [thread:$0]  %s3, 1024, %s64, [#allocation9], 64, 64, 4
    $region17: #{tpu_custom_call.1} parent=1 // pred_fallthru
      _
    // Predicated region
    $region18: #{tpu_custom_call.1} parent=1 // pred_check
      _
    $region19: #{tpu_custom_call.1} parent=1 // pred_check_branch
      %71 = sbr.rel (0) target = $region21
    $region20: #{tpu_custom_call.1} parent=1 // pred_region
      %s73 = ssub.s32 2048, 2048
      %74 = vsyncadd [#allocation9], %s73
      %s75 = sshll.u32 [#allocation10], 4
      %s76 = int_to_ptr.vmem [resolvable:$true] %s75
      %81 = dma.hbm_to_vmem [thread:$0]  %s4, 2048, %s76, [#allocation9], 128, 128, 8
    $region21: #{tpu_custom_call.1} parent=1 // pred_fallthru
      _
    // Predicated region
    $region22: #{tpu_custom_call.1} parent=1 // pred_check
      _
    $region23: #{tpu_custom_call.1} parent=1 // pred_check_branch
      %83 = sbr.rel (0) target = $region25
    $region24: #{tpu_custom_call.1} parent=1 // pred_region
      %s85 = ssub.s32 4096, 4096
      %86 = vsyncadd [#allocation12], %s85
      %s87 = sshll.u32 [#allocation11], 4
      %s88 = int_to_ptr.vmem [resolvable:$true] %s87
      %93 = dma.hbm_to_vmem [thread:$0]  %s5, 4096, %s88, [#allocation12], 128, 128, 8
    $region25: #{tpu_custom_call.1} parent=1 // pred_fallthru
      _
    // Predicated region
    $region26: #{tpu_custom_call.1} parent=1 // pred_check
      _
    $region27: #{tpu_custom_call.1} parent=1 // pred_check_branch
      %95 = sbr.rel (0) target = $region29
    $region28: #{tpu_custom_call.1} parent=1 // pred_region
      %s97 = ssub.s32 2048, 2048
      %98 = vsyncadd [#allocation12], %s97
      %s99 = sshll.u32 [#allocation13], 4
      %s100 = int_to_ptr.vmem [resolvable:$true] %s99
      %105 = dma.hbm_to_vmem [thread:$0]  %s6, 2048, %s100, [#allocation12], 64, 64, 4
    $region29: #{tpu_custom_call.1} parent=1 // pred_fallthru
      _
    // Predicated region
    $region30: #{tpu_custom_call.1} parent=1 // pred_check
      _
    $region31: #{tpu_custom_call.1} parent=1 // pred_check_branch
      %107 = sbr.rel (0) target = $region33
    $region32: #{tpu_custom_call.1} parent=1 // pred_region
      %s109 = ssub.s32 1024, 1024
      %110 = vsyncadd [#allocation15], %s109
      %s111 = sshll.u32 [#allocation14], 4
      %s112 = int_to_ptr.vmem [resolvable:$true] %s111
      %117 = dma.hbm_to_vmem [thread:$0]  %s7, 1024, %s112, [#allocation15], 64, 64, 4
    $region33: #{tpu_custom_call.1} parent=1 // pred_fallthru
      _
    // Predicated region
    $region34: #{tpu_custom_call.1} parent=1 // pred_check
      _
    $region35: #{tpu_custom_call.1} parent=1 // pred_check_branch
      %119 = sbr.rel (0) target = $region37
    $region36: #{tpu_custom_call.1} parent=1 // pred_region
      _
    $region37: #{tpu_custom_call.1} parent=1 // pred_fallthru
      _
    // Predicated region
    $region38: #{tpu_custom_call.1} parent=1 // pred_check
      _
    $region39: #{tpu_custom_call.1} parent=1 // pred_check_branch
      %121 = sbr.rel (0) target = $region41
    $region40: #{tpu_custom_call.1} parent=1 // pred_region
      _
    $region41: #{tpu_custom_call.1} parent=1 // pred_fallthru
      _
    // Predicated region
    $region42: #{tpu_custom_call.1} parent=1 // pred_check
      _
    $region43: #{tpu_custom_call.1} parent=1 // pred_check_branch
      %123 = sbr.rel (0) target = $region45
    $region44: #{tpu_custom_call.1} parent=1 // pred_region
      _
    $region45: #{tpu_custom_call.1} parent=1 // pred_fallthru
      _
    // Predicated region
    $region46: #{tpu_custom_call.1} parent=1 // pred_check
      _
    $region47: #{tpu_custom_call.1} parent=1 // pred_check_branch
      %125 = sbr.rel (0) target = $region49
    $region48: #{tpu_custom_call.1} parent=1 // pred_region
      %126 = dma.done [#allocation3], 256
    $region49: #{tpu_custom_call.1} parent=1 // pred_fallthru
      _
    // Predicated region
    $region50: #{tpu_custom_call.1} parent=1 // pred_check
      _
    $region51: #{tpu_custom_call.1} parent=1 // pred_check_branch
      %128 = sbr.rel (0) target = $region53
    $region52: #{tpu_custom_call.1} parent=1 // pred_region
      %129 = dma.done [#allocation6], 1024
    $region53: #{tpu_custom_call.1} parent=1 // pred_fallthru
      _
    // Predicated region
    $region54: #{tpu_custom_call.1} parent=1 // pred_check
      _
    $region55: #{tpu_custom_call.1} parent=1 // pred_check_branch
      %131 = sbr.rel (0) target = $region57
    $region56: #{tpu_custom_call.1} parent=1 // pred_region
      %132 = dma.done [#allocation6], 6144
    $region57: #{tpu_custom_call.1} parent=1 // pred_fallthru
      _
    // Predicated region
    $region58: #{tpu_custom_call.1} parent=1 // pred_check
      _
    $region59: #{tpu_custom_call.1} parent=1 // pred_check_branch
      %134 = sbr.rel (0) target = $region61
    $region60: #{tpu_custom_call.1} parent=1 // pred_region
      %135 = dma.done [#allocation9], 1024
    $region61: #{tpu_custom_call.1} parent=1 // pred_fallthru
      _
    // Predicated region
    $region62: #{tpu_custom_call.1} parent=1 // pred_check
      _
    $region63: #{tpu_custom_call.1} parent=1 // pred_check_branch
      %137 = sbr.rel (0) target = $region65
    $region64: #{tpu_custom_call.1} parent=1 // pred_region
      %138 = dma.done [#allocation9], 2048
    $region65: #{tpu_custom_call.1} parent=1 // pred_fallthru
      _
    // Predicated region
    $region66: #{tpu_custom_call.1} parent=1 // pred_check
      _
    $region67: #{tpu_custom_call.1} parent=1 // pred_check_branch
      %140 = sbr.rel (0) target = $region69
    $region68: #{tpu_custom_call.1} parent=1 // pred_region
      %141 = dma.done [#allocation12], 4096
    $region69: #{tpu_custom_call.1} parent=1 // pred_fallthru
      _
    // Predicated region
    $region70: #{tpu_custom_call.1} parent=1 // pred_check
      _
    $region71: #{tpu_custom_call.1} parent=1 // pred_check_branch
      %143 = sbr.rel (0) target = $region73
    $region72: #{tpu_custom_call.1} parent=1 // pred_region
      %144 = dma.done [#allocation12], 2048
    $region73: #{tpu_custom_call.1} parent=1 // pred_fallthru
      _
    // Predicated region
    $region74: #{tpu_custom_call.1} parent=1 // pred_check
      _
    $region75: #{tpu_custom_call.1} parent=1 // pred_check_branch
      %146 = sbr.rel (0) target = $region77
    $region76: #{tpu_custom_call.1} parent=1 // pred_region
      %147 = dma.done [#allocation15], 1024
    $region77: #{tpu_custom_call.1} parent=1 // pred_fallthru
      _
    %v149 = vld [vmem:[#allocation2] sm:$0xff]
    %v150 = vld [vmem:[#allocation2 + $0x8] sm:$0xff]
    %v151 = vpack.c.bf16 %v150, %v149
    %v152 = vld [vmem:[#allocation5] sm:$0xf]
    %v153 = vld [vmem:[#allocation5 + $0x4] sm:$0xf]
    %v154 = vld [vmem:[#allocation5 + $0x8] sm:$0xf]
    %v155 = vld [vmem:[#allocation5 + $0xc] sm:$0xf]
    %v156 = vld [vmem:[#allocation5 + $0x10] sm:$0xf]
    %v157 = vld [vmem:[#allocation5 + $0x14] sm:$0xf]
    %v158 = vld [vmem:[#allocation5 + $0x18] sm:$0xf]
    %v159 = vld [vmem:[#allocation5 + $0x1c] sm:$0xf]
    %v160 = vld [vmem:[#allocation5 + $0x20] sm:$0xf]
    %v161 = vld [vmem:[#allocation5 + $0x24] sm:$0xf]
    %v162 = vld [vmem:[#allocation5 + $0x28] sm:$0xf]
    %v163 = vld [vmem:[#allocation5 + $0x2c] sm:$0xf]
    %v164 = vld [vmem:[#allocation5 + $0x30] sm:$0xf]
    %v165 = vld [vmem:[#allocation5 + $0x34] sm:$0xf]
    %v166 = vld [vmem:[#allocation5 + $0x38] sm:$0xf]
    %v167 = vld [vmem:[#allocation5 + $0x3c] sm:$0xf]
    %v168 = vld [vmem:[%s8] sm:$0x3f]
    %v169 = vld [vmem:[%s9] sm:$0x7f]
    %v170 = vld [vmem:[%s10] sm:$0xf]
    %v171 = vld [vmem:[#allocation7] sm:$0xff]
    %v172 = vld [vmem:[#allocation7 + $0x8] sm:$0xff]
    %v173 = vld [vmem:[#allocation7 + $0x10] sm:$0xff]
    %v174 = vld [vmem:[#allocation7 + $0x18] sm:$0xff]
    %v175 = vld [vmem:[#allocation7 + $0x20] sm:$0xff]
    %v176 = vld [vmem:[#allocation7 + $0x28] sm:$0xff]
    %v177 = vld [vmem:[#allocation7 + $0x30] sm:$0xff]
    %v178 = vld [vmem:[#allocation7 + $0x38] sm:$0xff]
    %v179 = vld [vmem:[#allocation7 + $0x40] sm:$0xff]
    %v180 = vld [vmem:[#allocation7 + $0x48] sm:$0xff]
    %v181 = vld [vmem:[#allocation7 + $0x50] sm:$0xff]
    %v182 = vld [vmem:[#allocation7 + $0x58] sm:$0xff]
    %v183 = vld [vmem:[#allocation7 + $0x60] sm:$0xff]
    %v184 = vld [vmem:[#allocation7 + $0x68] sm:$0xff]
    %v185 = vld [vmem:[#allocation7 + $0x70] sm:$0xff]
    %v186 = vld [vmem:[#allocation7 + $0x78] sm:$0xff]
    %v187 = vld [vmem:[#allocation7 + $0x80] sm:$0xff]
    %v188 = vld [vmem:[#allocation7 + $0x88] sm:$0xff]
    %v189 = vld [vmem:[#allocation7 + $0x90] sm:$0xff]
    %v190 = vld [vmem:[#allocation7 + $0x98] sm:$0xff]
    %v191 = vld [vmem:[#allocation7 + $0xa0] sm:$0xff]
    %v192 = vld [vmem:[#allocation7 + $0xa8] sm:$0xff]
    %v193 = vld [vmem:[#allocation7 + $0xb0] sm:$0xff]
    %v194 = vld [vmem:[#allocation7 + $0xb8] sm:$0xff]
    %v195 = vld [vmem:[#allocation7 + $0xc0] sm:$0xff]
    %v196 = vld [vmem:[#allocation7 + $0xc8] sm:$0xff]
    %v197 = vld [vmem:[#allocation7 + $0xd0] sm:$0xff]
    %v198 = vld [vmem:[#allocation7 + $0xd8] sm:$0xff]
    %v199 = vld [vmem:[#allocation7 + $0xe0] sm:$0xff]
    %v200 = vld [vmem:[#allocation7 + $0xe8] sm:$0xff]
    %v201 = vld [vmem:[#allocation7 + $0xf0] sm:$0xff]
    %v202 = vld [vmem:[#allocation7 + $0xf8] sm:$0xff]
    %v203 = vld [vmem:[#allocation7 + $0x100] sm:$0xff]
    %v204 = vld [vmem:[#allocation7 + $0x108] sm:$0xff]
    %v205 = vld [vmem:[#allocation7 + $0x110] sm:$0xff]
    %v206 = vld [vmem:[#allocation7 + $0x118] sm:$0xff]
    %v207 = vld [vmem:[#allocation7 + $0x120] sm:$0xff]
    %v208 = vld [vmem:[#allocation7 + $0x128] sm:$0xff]
    %v209 = vld [vmem:[#allocation7 + $0x130] sm:$0xff]
    %v210 = vld [vmem:[#allocation7 + $0x138] sm:$0xff]
    %v211 = vld [vmem:[#allocation7 + $0x140] sm:$0xff]
    %v212 = vld [vmem:[#allocation7 + $0x148] sm:$0xff]
    %v213 = vld [vmem:[#allocation7 + $0x150] sm:$0xff]
    %v214 = vld [vmem:[#allocation7 + $0x158] sm:$0xff]
    %v215 = vld [vmem:[#allocation7 + $0x160] sm:$0xff]
    %v216 = vld [vmem:[#allocation7 + $0x168] sm:$0xff]
    %v217 = vld [vmem:[#allocation7 + $0x170] sm:$0xff]
    %v218 = vld [vmem:[#allocation7 + $0x178] sm:$0xff]
    %v220 = vlaneseq
    %v221 = vshrl.u32 %v220, 7
    %v222 = vsub.s32 0, %v221
    %v223 = vrot.slane %v168, %v222
    %v224 = vlaneseq
    %v225 = vshrl.u32 %v224, 7
    %v226 = vsub.s32 1, %v225
    %v227 = vrot.slane %v168, %v226
    %v228 = vlaneseq
    %v229 = vshrl.u32 %v228, 7
    %v230 = vsub.s32 2, %v229
    %v231 = vrot.slane %v168, %v230
    %v232 = vlaneseq
    %v233 = vshrl.u32 %v232, 7
    %v234 = vsub.s32 3, %v233
    %v235 = vrot.slane %v168, %v234
    %v236 = vlaneseq
    %v237 = vshrl.u32 %v236, 7
    %v238 = vsub.s32 4, %v237
    %v239 = vrot.slane %v168, %v238
    %v240 = vlaneseq
    %v241 = vshrl.u32 %v240, 7
    %v242 = vsub.s32 5, %v241
    %v243 = vrot.slane %v168, %v242
    %v298 = vunpack.c.l.b16 %v171
    %v299 = vunpack.c.h.b16 %v171
    %v300 = vunpack.c.l.b16 %v172
    %v301 = vunpack.c.h.b16 %v172
    %v302 = vunpack.c.l.b16 %v173
    %v303 = vunpack.c.h.b16 %v173
    %v304 = vunpack.c.l.b16 %v174
    %v305 = vunpack.c.h.b16 %v174
    %v306 = vunpack.c.l.b16 %v175
    %v307 = vunpack.c.h.b16 %v175
    %v308 = vunpack.c.l.b16 %v176
    %v309 = vunpack.c.h.b16 %v176
    %v310 = vunpack.c.l.b16 %v177
    %v311 = vunpack.c.h.b16 %v177
    %v312 = vunpack.c.l.b16 %v178
    %v313 = vunpack.c.h.b16 %v178
    %v314 = vunpack.c.l.b16 %v179
    %v315 = vunpack.c.h.b16 %v179
    %v316 = vunpack.c.l.b16 %v180
    %v317 = vunpack.c.h.b16 %v180
    %v318 = vunpack.c.l.b16 %v181
    %v319 = vunpack.c.h.b16 %v181
    %v320 = vunpack.c.l.b16 %v182
    %v321 = vunpack.c.h.b16 %v182
    %v322 = vunpack.c.l.b16 %v183
    %v323 = vunpack.c.h.b16 %v183
    %v324 = vunpack.c.l.b16 %v184
    %v325 = vunpack.c.h.b16 %v184
    %v326 = vunpack.c.l.b16 %v185
    %v327 = vunpack.c.h.b16 %v185
    %v328 = vunpack.c.l.b16 %v186
    %v329 = vunpack.c.h.b16 %v186
    %v330 = vunpack.c.l.b16 %v187
    %v331 = vunpack.c.h.b16 %v187
    %v332 = vunpack.c.l.b16 %v188
    %v333 = vunpack.c.h.b16 %v188
    %v334 = vunpack.c.l.b16 %v189
    %v335 = vunpack.c.h.b16 %v189
    %v336 = vunpack.c.l.b16 %v190
    %v337 = vunpack.c.h.b16 %v190
    %v338 = vunpack.c.l.b16 %v191
    %v339 = vunpack.c.h.b16 %v191
    %v340 = vunpack.c.l.b16 %v192
    %v341 = vunpack.c.h.b16 %v192
    %v342 = vunpack.c.l.b16 %v193
    %v343 = vunpack.c.h.b16 %v193
    %v344 = vunpack.c.l.b16 %v194
    %v345 = vunpack.c.h.b16 %v194
    %v346 = vunpack.c.l.b16 %v195
    %v347 = vunpack.c.h.b16 %v195
    %v348 = vunpack.c.l.b16 %v196
    %v349 = vunpack.c.h.b16 %v196
    %v350 = vunpack.c.l.b16 %v197
    %v351 = vunpack.c.h.b16 %v197
    %v352 = vunpack.c.l.b16 %v198
    %v353 = vunpack.c.h.b16 %v198
    %v354 = vunpack.c.l.b16 %v199
    %v355 = vunpack.c.h.b16 %v199
    %v356 = vunpack.c.l.b16 %v200
    %v357 = vunpack.c.h.b16 %v200
    %v358 = vunpack.c.l.b16 %v201
    %v359 = vunpack.c.h.b16 %v201
    %v360 = vunpack.c.l.b16 %v202
    %v361 = vunpack.c.h.b16 %v202
    %v362 = vunpack.c.l.b16 %v203
    %v363 = vunpack.c.h.b16 %v203
    %v364 = vunpack.c.l.b16 %v204
    %v365 = vunpack.c.h.b16 %v204
    %v366 = vunpack.c.l.b16 %v205
    %v367 = vunpack.c.h.b16 %v205
    %v368 = vunpack.c.l.b16 %v206
    %v369 = vunpack.c.h.b16 %v206
    %v370 = vunpack.c.l.b16 %v207
    %v371 = vunpack.c.h.b16 %v207
    %v372 = vunpack.c.l.b16 %v208
    %v373 = vunpack.c.h.b16 %v208
    %v374 = vunpack.c.l.b16 %v209
    %v375 = vunpack.c.h.b16 %v209
    %v376 = vunpack.c.l.b16 %v210
    %v377 = vunpack.c.h.b16 %v210
    %v378 = vunpack.c.l.b16 %v211
    %v379 = vunpack.c.h.b16 %v211
    %v380 = vunpack.c.l.b16 %v212
    %v381 = vunpack.c.h.b16 %v212
    %v382 = vunpack.c.l.b16 %v213
    %v383 = vunpack.c.h.b16 %v213
    %v384 = vunpack.c.l.b16 %v214
    %v385 = vunpack.c.h.b16 %v214
    %v386 = vunpack.c.l.b16 %v215
    %v387 = vunpack.c.h.b16 %v215
    %v388 = vunpack.c.l.b16 %v216
    %v389 = vunpack.c.h.b16 %v216
    %v390 = vunpack.c.l.b16 %v217
    %v391 = vunpack.c.h.b16 %v217
    %v392 = vunpack.c.l.b16 %v218
    %v393 = vunpack.c.h.b16 %v218
    %v394 = vpack.c.b16 %v304, %v298
    %v395 = vpack.c.b16 %v305, %v299
    %v396 = vpack.c.b16 %v306, %v300
    %v397 = vpack.c.b16 %v307, %v301
    %v398 = vpack.c.b16 %v308, %v302
    %v399 = vpack.c.b16 %v309, %v303
    %v400 = vpack.c.b16 %v316, %v310
    %v401 = vpack.c.b16 %v317, %v311
    %v402 = vpack.c.b16 %v318, %v312
    %v403 = vpack.c.b16 %v319, %v313
    %v404 = vpack.c.b16 %v320, %v314
    %v405 = vpack.c.b16 %v321, %v315
    %v406 = vpack.c.b16 %v328, %v322
    %v407 = vpack.c.b16 %v329, %v323
    %v408 = vpack.c.b16 %v330, %v324
    %v409 = vpack.c.b16 %v331, %v325
    %v410 = vpack.c.b16 %v332, %v326
    %v411 = vpack.c.b16 %v333, %v327
    %v412 = vpack.c.b16 %v340, %v334
    %v413 = vpack.c.b16 %v341, %v335
    %v414 = vpack.c.b16 %v342, %v336
    %v415 = vpack.c.b16 %v343, %v337
    %v416 = vpack.c.b16 %v344, %v338
    %v417 = vpack.c.b16 %v345, %v339
    %v418 = vpack.c.b16 %v352, %v346
    %v419 = vpack.c.b16 %v353, %v347
    %v420 = vpack.c.b16 %v354, %v348
    %v421 = vpack.c.b16 %v355, %v349
    %v422 = vpack.c.b16 %v356, %v350
    %v423 = vpack.c.b16 %v357, %v351
    %v424 = vpack.c.b16 %v364, %v358
    %v425 = vpack.c.b16 %v365, %v359
    %v426 = vpack.c.b16 %v366, %v360
    %v427 = vpack.c.b16 %v367, %v361
    %v428 = vpack.c.b16 %v368, %v362
    %v429 = vpack.c.b16 %v369, %v363
    %v430 = vpack.c.b16 %v376, %v370
    %v431 = vpack.c.b16 %v377, %v371
    %v432 = vpack.c.b16 %v378, %v372
    %v433 = vpack.c.b16 %v379, %v373
    %v434 = vpack.c.b16 %v380, %v374
    %v435 = vpack.c.b16 %v381, %v375
    %v436 = vpack.c.b16 %v388, %v382
    %v437 = vpack.c.b16 %v389, %v383
    %v438 = vpack.c.b16 %v390, %v384
    %v439 = vpack.c.b16 %v391, %v385
    %v440 = vpack.c.b16 %v392, %v386
    %v441 = vpack.c.b16 %v393, %v387
    %490 = vmatprep.subr.bf16.mxu0 %v395
    %491 = vmatpush1.bf16.msra.mxu0 %v394
    %492 = vmatprep.subr.bf16.mxu0 %v401
    %493 = vmatpush1.bf16.msra.mxu0 %v400
    %494 = vmatprep.subr.bf16.mxu0 %v407
    %495 = vmatpush1.bf16.msra.mxu0 %v406
    %496 = vmatprep.subr.bf16.mxu0 %v413
    %497 = vmatpush1.bf16.msra.mxu0 %v412
    %498 = vmatprep.subr.bf16.mxu0 %v419
    %499 = vmatpush1.bf16.msra.mxu0 %v418
    %500 = vmatprep.subr.bf16.mxu0 %v425
    %501 = vmatpush1.bf16.msra.mxu0 %v424
    %502 = vmatprep.subr.bf16.mxu0 %v431
    %503 = vmatpush1.bf16.msra.mxu0 %v430
    %504 = vmatprep.subr.bf16.mxu0 %v437
    %505 = vmatpush1.bf16.msra.mxu0 %v436
    %506 = vmatprep.subr.bf16.mxu0 0
    %507 = vmatpush1.bf16.msra.mxu0 0
    %508 = vmatprep.subr.bf16.mxu0 0
    %509 = vmatpush1.bf16.msra.mxu0 0
    %510 = vmatprep.subr.bf16.mxu0 0
    %511 = vmatpush1.bf16.msra.mxu0 0
    %512 = vmatprep.subr.bf16.mxu0 0
    %513 = vmatpush1.bf16.msra.mxu0 0
    %514 = vmatprep.subr.bf16.mxu0 0
    %515 = vmatpush1.bf16.msra.mxu0 0
    %516 = vmatprep.subr.bf16.mxu0 0
    %517 = vmatpush1.bf16.msra.mxu0 0
    %518 = vmatprep.subr.bf16.mxu0 0
    %519 = vmatpush1.bf16.msra.mxu0 0
    %520 = vmatprep.subr.bf16.mxu0 0
    %521 = vmatpush1.bf16.msra.mxu0 0
    %522 = vmatprep.mubr.bf16.mxu0 0
    %523 = vmatmul.mubr.bf16.gmra.mrb[0].mxu0 %v151
    %v524 = vpop.f32.mrb[0].mxu0
    %v525 = vadd.f32 %v223, %v524
    %v526 = vpop.f32.mrb[0].mxu0
    %v527 = vadd.f32 %v227, %v526
    %v528 = vpop.f32.mrb[0].mxu0
    %v529 = vadd.f32 %v223, %v528
    %v530 = vpop.f32.mrb[0].mxu0
    %v531 = vadd.f32 %v227, %v530
    %532 = vdwg.mxu0
    %533 = vmatprep.subr.bf16.mxu0 %v397
    %534 = vmatpush1.bf16.msra.mxu0 %v396
    %535 = vmatprep.subr.bf16.mxu0 %v403
    %536 = vmatpush1.bf16.msra.mxu0 %v402
    %537 = vmatprep.subr.bf16.mxu0 %v409
    %538 = vmatpush1.bf16.msra.mxu0 %v408
    %539 = vmatprep.subr.bf16.mxu0 %v415
    %540 = vmatpush1.bf16.msra.mxu0 %v414
    %541 = vmatprep.subr.bf16.mxu0 %v421
    %542 = vmatpush1.bf16.msra.mxu0 %v420
    %543 = vmatprep.subr.bf16.mxu0 %v427
    %544 = vmatpush1.bf16.msra.mxu0 %v426
    %545 = vmatprep.subr.bf16.mxu0 %v433
    %546 = vmatpush1.bf16.msra.mxu0 %v432
    %547 = vmatprep.subr.bf16.mxu0 %v439
    %548 = vmatpush1.bf16.msra.mxu0 %v438
    %549 = vmatprep.subr.bf16.mxu0 0
    %550 = vmatpush1.bf16.msra.mxu0 0
    %551 = vmatprep.subr.bf16.mxu0 0
    %552 = vmatpush1.bf16.msra.mxu0 0
    %553 = vmatprep.subr.bf16.mxu0 0
    %554 = vmatpush1.bf16.msra.mxu0 0
    %555 = vmatprep.subr.bf16.mxu0 0
    %556 = vmatpush1.bf16.msra.mxu0 0
    %557 = vmatprep.subr.bf16.mxu0 0
    %558 = vmatpush1.bf16.msra.mxu0 0
    %559 = vmatprep.subr.bf16.mxu0 0
    %560 = vmatpush1.bf16.msra.mxu0 0
    %561 = vmatprep.subr.bf16.mxu0 0
    %562 = vmatpush1.bf16.msra.mxu0 0
    %563 = vmatprep.subr.bf16.mxu0 0
    %564 = vmatpush1.bf16.msra.mxu0 0
    %565 = vmatprep.mubr.bf16.mxu0 0
    %566 = vmatmul.mubr.bf16.gmra.mrb[0].mxu0 %v151
    %v567 = vpop.f32.mrb[0].mxu0
    %v568 = vadd.f32 %v231, %v567
    %v569 = vpop.f32.mrb[0].mxu0
    %v570 = vadd.f32 %v235, %v569
    %v571 = vpop.f32.mrb[0].mxu0
    %v572 = vadd.f32 %v231, %v571
    %v573 = vpop.f32.mrb[0].mxu0
    %v574 = vadd.f32 %v235, %v573
    %575 = vdwg.mxu0
    %576 = vmatprep.subr.bf16.mxu0 %v399
    %577 = vmatpush1.bf16.msra.mxu0 %v398
    %578 = vmatprep.subr.bf16.mxu0 %v405
    %579 = vmatpush1.bf16.msra.mxu0 %v404
    %580 = vmatprep.subr.bf16.mxu0 %v411
    %581 = vmatpush1.bf16.msra.mxu0 %v410
    %582 = vmatprep.subr.bf16.mxu0 %v417
    %583 = vmatpush1.bf16.msra.mxu0 %v416
    %584 = vmatprep.subr.bf16.mxu0 %v423
    %585 = vmatpush1.bf16.msra.mxu0 %v422
    %586 = vmatprep.subr.bf16.mxu0 %v429
    %587 = vmatpush1.bf16.msra.mxu0 %v428
    %588 = vmatprep.subr.bf16.mxu0 %v435
    %589 = vmatpush1.bf16.msra.mxu0 %v434
    %590 = vmatprep.subr.bf16.mxu0 %v441
    %591 = vmatpush1.bf16.msra.mxu0 %v440
    %592 = vmatprep.subr.bf16.mxu0 0
    %593 = vmatpush1.bf16.msra.mxu0 0
    %594 = vmatprep.subr.bf16.mxu0 0
    %595 = vmatpush1.bf16.msra.mxu0 0
    %596 = vmatprep.subr.bf16.mxu0 0
    %597 = vmatpush1.bf16.msra.mxu0 0
    %598 = vmatprep.subr.bf16.mxu0 0
    %599 = vmatpush1.bf16.msra.mxu0 0
    %600 = vmatprep.subr.bf16.mxu0 0
    %601 = vmatpush1.bf16.msra.mxu0 0
    %602 = vmatprep.subr.bf16.mxu0 0
    %603 = vmatpush1.bf16.msra.mxu0 0
    %604 = vmatprep.subr.bf16.mxu0 0
    %605 = vmatpush1.bf16.msra.mxu0 0
    %606 = vmatprep.subr.bf16.mxu0 0
    %607 = vmatpush1.bf16.msra.mxu0 0
    %608 = vmatprep.mubr.bf16.mxu0 0
    %609 = vmatmul.mubr.bf16.gmra.mrb[0].mxu0 %v151
    %v610 = vpop.f32.mrb[0].mxu0
    %v611 = vadd.f32 %v239, %v610
    %v612 = vpop.f32.mrb[0].mxu0
    %v613 = vadd.f32 %v243, %v612
    %v614 = vpop.f32.mrb[0].mxu0
    %v615 = vadd.f32 %v239, %v614
    %v616 = vpop.f32.mrb[0].mxu0
    %v617 = vadd.f32 %v243, %v616
    %618 = vdwg.mxu0
    %vm619 = vcmp.gt.f32.partialorder %v525, 0.0
    %vm620 = vcmp.gt.f32.partialorder %v529, 0.0
    %v621 = vmul.f32 %v525, 1.442695
    %v622 = vpow.pop %v621
    %v623 = vmul.f32 %v529, 1.442695
    %v624 = vpow.pop %v623
    %v625 = vsub.f32 %v622, 1.0
    %v626 = vsub.f32 %v624, 1.0
    %v627 = vsel %vm619, %v525, %v625
    %v628 = vsel %vm620, %v529, %v626
    %vm629 = vcmp.gt.f32.partialorder %v527, 0.0
    %vm630 = vcmp.gt.f32.partialorder %v531, 0.0
    %v631 = vmul.f32 %v527, 1.442695
    %v632 = vpow.pop %v631
    %v633 = vmul.f32 %v531, 1.442695
    %v634 = vpow.pop %v633
    %v635 = vsub.f32 %v632, 1.0
    %v636 = vsub.f32 %v634, 1.0
    %v637 = vsel %vm629, %v527, %v635
    %v638 = vsel %vm630, %v531, %v636
    %v639 = vmul.f32 %v627, %v627
    %v640 = vmul.f32 %v628, %v628
    %v641 = vmul.f32 %v637, %v637
    %v642 = vmul.f32 %v638, %v638
    %v643 = vpack.c.bf16 %v640, %v639
    %v644 = vpack.c.bf16 %v642, %v641
    %v661 = vunpack.c.l.b16 %v152
    %v662 = vunpack.c.l.b16 %v153
    %v663 = vunpack.c.l.b16 %v154
    %v664 = vunpack.c.l.b16 %v155
    %v665 = vunpack.c.l.b16 %v156
    %v666 = vunpack.c.l.b16 %v157
    %v667 = vunpack.c.l.b16 %v158
    %v668 = vunpack.c.l.b16 %v159
    %v669 = vunpack.c.l.b16 %v160
    %v670 = vunpack.c.l.b16 %v161
    %v671 = vunpack.c.l.b16 %v162
    %v672 = vunpack.c.l.b16 %v163
    %v673 = vunpack.c.l.b16 %v164
    %v674 = vunpack.c.l.b16 %v165
    %v675 = vunpack.c.l.b16 %v166
    %v676 = vunpack.c.l.b16 %v167
    %v677 = vpack.c.b16 %v662, %v661
    %v678 = vpack.c.b16 %v664, %v663
    %v679 = vpack.c.b16 %v666, %v665
    %v680 = vpack.c.b16 %v668, %v667
    %v681 = vpack.c.b16 %v670, %v669
    %v682 = vpack.c.b16 %v672, %v671
    %v683 = vpack.c.b16 %v674, %v673
    %v684 = vpack.c.b16 %v676, %v675
    %693 = vmatprep.subr.bf16.mxu0 0
    %694 = vmatpush1.bf16.msra.mxu0 %v677
    %695 = vmatprep.subr.bf16.mxu0 0
    %696 = vmatpush1.bf16.msra.mxu0 %v678
    %697 = vmatprep.subr.bf16.mxu0 0
    %698 = vmatpush1.bf16.msra.mxu0 %v679
    %699 = vmatprep.subr.bf16.mxu0 0
    %700 = vmatpush1.bf16.msra.mxu0 %v680
    %701 = vmatprep.subr.bf16.mxu0 0
    %702 = vmatpush1.bf16.msra.mxu0 %v681
    %703 = vmatprep.subr.bf16.mxu0 0
    %704 = vmatpush1.bf16.msra.mxu0 %v682
    %705 = vmatprep.subr.bf16.mxu0 0
    %706 = vmatpush1.bf16.msra.mxu0 %v683
    %707 = vmatprep.subr.bf16.mxu0 0
    %708 = vmatpush1.bf16.msra.mxu0 %v684
    %709 = vmatprep.subr.bf16.mxu0 0
    %710 = vmatpush1.bf16.msra.mxu0 0
    %711 = vmatprep.subr.bf16.mxu0 0
    %712 = vmatpush1.bf16.msra.mxu0 0
    %713 = vmatprep.subr.bf16.mxu0 0
    %714 = vmatpush1.bf16.msra.mxu0 0
    %715 = vmatprep.subr.bf16.mxu0 0
    %716 = vmatpush1.bf16.msra.mxu0 0
    %717 = vmatprep.subr.bf16.mxu0 0
    %718 = vmatpush1.bf16.msra.mxu0 0
    %719 = vmatprep.subr.bf16.mxu0 0
    %720 = vmatpush1.bf16.msra.mxu0 0
    %721 = vmatprep.subr.bf16.mxu0 0
    %722 = vmatpush1.bf16.msra.mxu0 0
    %723 = vmatprep.subr.bf16.mxu0 0
    %724 = vmatpush1.bf16.msra.mxu0 0
    %725 = vmatprep.mubr.bf16.mxu0 0
    %726 = vmatmul.mubr.bf16.gmra.mrb[0].mxu0 %v643
    %v727 = vpop.f32.mrb[0].mxu0
    %v728 = vadd.f32 0.0, %v727
    %v729 = vpop.f32.mrb[0].mxu0
    %v730 = vpop.f32.mrb[0].mxu0
    %v731 = vadd.f32 0.0, %v730
    %v732 = vpop.f32.mrb[0].mxu0
    %733 = vmatprep.mubr.bf16.mxu0 0
    %734 = vmatmul.mubr.bf16.gmra.mrb[0].mxu0 %v644
    %v735 = vpop.f32.mrb[0].mxu0
    %v736 = vadd.f32 0.0, %v735
    %v737 = vpop.f32.mrb[0].mxu0
    %v738 = vpop.f32.mrb[0].mxu0
    %v739 = vadd.f32 0.0, %v738
    %v740 = vpop.f32.mrb[0].mxu0
    %741 = vdwg.mxu0
    %v742 = vrsqrt.pop %v728
    %v743 = vrsqrt.pop %v731
    %v744 = vrsqrt.pop %v736
    %v745 = vrsqrt.pop %v739
    %v746 = vmul.f32 %v627, %v742
    %v747 = vmul.f32 %v628, %v743
    %v748 = vpack.c.bf16 %v747, %v746
    %v749 = vmul.f32 %v637, %v744
    %v750 = vmul.f32 %v638, %v745
    %v751 = vpack.c.bf16 %v750, %v749
    %v753 = vunpack.c.l.b16 %v748
    %v754 = vunpack.c.h.b16 %v748
    %v755 = vpack.c.b16 %v753, %v753
    %v756 = vpack.c.b16 %v754, %v754
    %v760 = vunpack.c.l.b16 %v751
    %v761 = vunpack.c.h.b16 %v751
    %v762 = vpack.c.b16 %v760, %v760
    %v763 = vpack.c.b16 %v761, %v761
    %v766 = vpack.c.bf16 %v572, %v568
    %v768 = vunpack.c.l.b16 %v766
    %v769 = vunpack.c.h.b16 %v766
    %v770 = vpack.c.b16 %v768, %v768
    %v771 = vpack.c.b16 %v769, %v769
    %772 = vxpose.xlu0.c.b16.start [1/8] %v762, 128
    %773 = vxpose.xlu0.c.b16.cont [2/8] 0, 128
    %774 = vxpose.xlu0.c.b16.cont [3/8] 0, 128
    %775 = vxpose.xlu0.c.b16.cont [4/8] 0, 128
    %776 = vxpose.xlu0.c.b16.cont [5/8] 0, 128
    %777 = vxpose.xlu0.c.b16.cont [6/8] 0, 128
    %778 = vxpose.xlu0.c.b16.cont [7/8] 0, 128
    %779 = vxpose.xlu0.c.b16.end [8/8] 0, 128
    %v780 = vpop.trf.xlu0
    %v781 = vpop.trf.xlu0
    %v782 = vpop.trf.xlu0
    %v783 = vpop.trf.xlu0
    %v784 = vpop.trf.xlu0
    %v785 = vpop.trf.xlu0
    %v786 = vpop.trf.xlu0
    %v787 = vpop.trf.xlu0
    %vm788 = vcmask 64512
    %v790 = vsel %vm788, %v780, 0
    %v793 = vsel %vm788, %v781, 0
    %v796 = vsel %vm788, %v782, 0
    %v799 = vsel %vm788, %v783, 0
    %v802 = vsel %vm788, %v784, 0
    %v805 = vsel %vm788, %v785, 0
    %v808 = vsel %vm788, %v786, 0
    %v811 = vsel %vm788, %v787, 0
    %vm813 = vcmask 1043456
    %v815 = vsel %vm813, %v770, 0
    %817 = vmatprep.subr.bf16.mxu0 0
    %818 = vmatpush1.bf16.msra.mxu0 %v815
    %819 = vmatprep.subr.bf16.mxu0 0
    %820 = vmatpush1.bf16.msra.mxu0 0
    %821 = vmatprep.subr.bf16.mxu0 0
    %822 = vmatpush1.bf16.msra.mxu0 0
    %823 = vmatprep.subr.bf16.mxu0 0
    %824 = vmatpush1.bf16.msra.mxu0 0
    %825 = vmatprep.subr.bf16.mxu0 0
    %826 = vmatpush1.bf16.msra.mxu0 0
    %827 = vmatprep.subr.bf16.mxu0 0
    %828 = vmatpush1.bf16.msra.mxu0 0
    %829 = vmatprep.subr.bf16.mxu0 0
    %830 = vmatpush1.bf16.msra.mxu0 0
    %831 = vmatprep.subr.bf16.mxu0 0
    %832 = vmatpush1.bf16.msra.mxu0 0
    %833 = vmatprep.subr.bf16.mxu0 0
    %834 = vmatpush1.bf16.msra.mxu0 0
    %835 = vmatprep.subr.bf16.mxu0 0
    %836 = vmatpush1.bf16.msra.mxu0 0
    %837 = vmatprep.subr.bf16.mxu0 0
    %838 = vmatpush1.bf16.msra.mxu0 0
    %839 = vmatprep.subr.bf16.mxu0 0
    %840 = vmatpush1.bf16.msra.mxu0 0
    %841 = vmatprep.subr.bf16.mxu0 0
    %842 = vmatpush1.bf16.msra.mxu0 0
    %843 = vmatprep.subr.bf16.mxu0 0
    %844 = vmatpush1.bf16.msra.mxu0 0
    %845 = vmatprep.subr.bf16.mxu0 0
    %846 = vmatpush1.bf16.msra.mxu0 0
    %847 = vmatprep.subr.bf16.mxu0 0
    %848 = vmatpush1.bf16.msra.mxu0 0
    %849 = vmatprep.mubr.bf16.mxu0 0
    %850 = vmatmul.mubr.bf16.gmra.mrb[0].mxu0 %v790
    %v851 = vpop.f32.mrb[0].mxu0
    %v852 = vadd.f32 0.0, %v851
    %v853 = vpop.f32.mrb[0].mxu0
    %v854 = vpop.f32.mrb[0].mxu0
    %v855 = vadd.f32 0.0, %v854
    %v856 = vpop.f32.mrb[0].mxu0
    %857 = vmatprep.mubr.bf16.mxu0 0
    %858 = vmatmul.mubr.bf16.gmra.mrb[0].mxu0 %v793
    %v859 = vpop.f32.mrb[0].mxu0
    %v860 = vadd.f32 0.0, %v859
    %v861 = vpop.f32.mrb[0].mxu0
    %v862 = vpop.f32.mrb[0].mxu0
    %v863 = vadd.f32 0.0, %v862
    %v864 = vpop.f32.mrb[0].mxu0
    %865 = vmatprep.mubr.bf16.mxu0 0
    %866 = vmatmul.mubr.bf16.gmra.mrb[0].mxu0 %v796
    %v867 = vpop.f32.mrb[0].mxu0
    %v868 = vadd.f32 0.0, %v867
    %v869 = vpop.f32.mrb[0].mxu0
    %v870 = vpop.f32.mrb[0].mxu0
    %v871 = vadd.f32 0.0, %v870
    %v872 = vpop.f32.mrb[0].mxu0
    %873 = vmatprep.mubr.bf16.mxu0 0
    %874 = vmatmul.mubr.bf16.gmra.mrb[0].mxu0 %v799
    %v875 = vpop.f32.mrb[0].mxu0
    %v876 = vadd.f32 0.0, %v875
    %v877 = vpop.f32.mrb[0].mxu0
    %v878 = vpop.f32.mrb[0].mxu0
    %v879 = vadd.f32 0.0, %v878
    %v880 = vpop.f32.mrb[0].mxu0
    %881 = vmatprep.mubr.bf16.mxu0 0
    %882 = vmatmul.mubr.bf16.gmra.mrb[0].mxu0 %v802
    %v883 = vpop.f32.mrb[0].mxu0
    %v884 = vadd.f32 0.0, %v883
    %v885 = vpop.f32.mrb[0].mxu0
    %v886 = vpop.f32.mrb[0].mxu0
    %v887 = vadd.f32 0.0, %v886
    %v888 = vpop.f32.mrb[0].mxu0
    %889 = vmatprep.mubr.bf16.mxu0 0
    %890 = vmatmul.mubr.bf16.gmra.mrb[0].mxu0 %v805
    %v891 = vpop.f32.mrb[0].mxu0
    %v892 = vadd.f32 0.0, %v891
    %v893 = vpop.f32.mrb[0].mxu0
    %v894 = vpop.f32.mrb[0].mxu0
    %v895 = vadd.f32 0.0, %v894
    %v896 = vpop.f32.mrb[0].mxu0
    %897 = vmatprep.mubr.bf16.mxu0 0
    %898 = vmatmul.mubr.bf16.gmra.mrb[0].mxu0 %v808
    %v899 = vpop.f32.mrb[0].mxu0
    %v900 = vadd.f32 0.0, %v899
    %v901 = vpop.f32.mrb[0].mxu0
    %v902 = vpop.f32.mrb[0].mxu0
    %v903 = vadd.f32 0.0, %v902
    %v904 = vpop.f32.mrb[0].mxu0
    %905 = vmatprep.mubr.bf16.mxu0 0
    %906 = vmatmul.mubr.bf16.gmra.mrb[0].mxu0 %v811
    %v907 = vpop.f32.mrb[0].mxu0
    %v908 = vadd.f32 0.0, %v907
    %v909 = vpop.f32.mrb[0].mxu0
    %v910 = vpop.f32.mrb[0].mxu0
    %v911 = vadd.f32 0.0, %v910
    %v912 = vpop.f32.mrb[0].mxu0
    %913 = vdwg.mxu0
    %914 = vxpose.xlu0.c.b16.start [1/8] %v763, 128
    %915 = vxpose.xlu0.c.b16.cont [2/8] 0, 128
    %916 = vxpose.xlu0.c.b16.cont [3/8] 0, 128
    %917 = vxpose.xlu0.c.b16.cont [4/8] 0, 128
    %918 = vxpose.xlu0.c.b16.cont [5/8] 0, 128
    %919 = vxpose.xlu0.c.b16.cont [6/8] 0, 128
    %920 = vxpose.xlu0.c.b16.cont [7/8] 0, 128
    %921 = vxpose.xlu0.c.b16.end [8/8] 0, 128
    %v922 = vpop.trf.xlu0
    %v923 = vpop.trf.xlu0
    %v924 = vpop.trf.xlu0
    %v925 = vpop.trf.xlu0
    %v926 = vpop.trf.xlu0
    %v927 = vpop.trf.xlu0
    %v928 = vpop.trf.xlu0
    %v929 = vpop.trf.xlu0
    %v931 = vsel %vm788, %v922, 0
    %v934 = vsel %vm788, %v923, 0
    %v937 = vsel %vm788, %v924, 0
    %v940 = vsel %vm788, %v925, 0
    %v943 = vsel %vm788, %v926, 0
    %v946 = vsel %vm788, %v927, 0
    %v949 = vsel %vm788, %v928, 0
    %v952 = vsel %vm788, %v929, 0
    %v955 = vsel %vm813, %v771, 0
    %957 = vmatprep.subr.bf16.mxu0 0
    %958 = vmatpush1.bf16.msra.mxu0 %v955
    %959 = vmatprep.subr.bf16.mxu0 0
    %960 = vmatpush1.bf16.msra.mxu0 0
    %961 = vmatprep.subr.bf16.mxu0 0
    %962 = vmatpush1.bf16.msra.mxu0 0
    %963 = vmatprep.subr.bf16.mxu0 0
    %964 = vmatpush1.bf16.msra.mxu0 0
    %965 = vmatprep.subr.bf16.mxu0 0
    %966 = vmatpush1.bf16.msra.mxu0 0
    %967 = vmatprep.subr.bf16.mxu0 0
    %968 = vmatpush1.bf16.msra.mxu0 0
    %969 = vmatprep.subr.bf16.mxu0 0
    %970 = vmatpush1.bf16.msra.mxu0 0
    %971 = vmatprep.subr.bf16.mxu0 0
    %972 = vmatpush1.bf16.msra.mxu0 0
    %973 = vmatprep.subr.bf16.mxu0 0
    %974 = vmatpush1.bf16.msra.mxu0 0
    %975 = vmatprep.subr.bf16.mxu0 0
    %976 = vmatpush1.bf16.msra.mxu0 0
    %977 = vmatprep.subr.bf16.mxu0 0
    %978 = vmatpush1.bf16.msra.mxu0 0
    %979 = vmatprep.subr.bf16.mxu0 0
    %980 = vmatpush1.bf16.msra.mxu0 0
    %981 = vmatprep.subr.bf16.mxu0 0
    %982 = vmatpush1.bf16.msra.mxu0 0
    %983 = vmatprep.subr.bf16.mxu0 0
    %984 = vmatpush1.bf16.msra.mxu0 0
    %985 = vmatprep.subr.bf16.mxu0 0
    %986 = vmatpush1.bf16.msra.mxu0 0
    %987 = vmatprep.subr.bf16.mxu0 0
    %988 = vmatpush1.bf16.msra.mxu0 0
    %989 = vmatprep.mubr.bf16.mxu0 0
    %990 = vmatmul.mubr.bf16.gmra.mrb[0].mxu0 %v931
    %v991 = vpop.f32.mrb[0].mxu0
    %v992 = vadd.f32 0.0, %v991
    %v993 = vpop.f32.mrb[0].mxu0
    %v994 = vpop.f32.mrb[0].mxu0
    %v995 = vadd.f32 0.0, %v994
    %v996 = vpop.f32.mrb[0].mxu0
    %997 = vmatprep.mubr.bf16.mxu0 0
    %998 = vmatmul.mubr.bf16.gmra.mrb[0].mxu0 %v934
    %v999 = vpop.f32.mrb[0].mxu0
    %v1000 = vadd.f32 0.0, %v999
    %v1001 = vpop.f32.mrb[0].mxu0
    %v1002 = vpop.f32.mrb[0].mxu0
    %v1003 = vadd.f32 0.0, %v1002
    %v1004 = vpop.f32.mrb[0].mxu0
    %1005 = vmatprep.mubr.bf16.mxu0 0
    %1006 = vmatmul.mubr.bf16.gmra.mrb[0].mxu0 %v937
    %v1007 = vpop.f32.mrb[0].mxu0
    %v1008 = vadd.f32 0.0, %v1007
    %v1009 = vpop.f32.mrb[0].mxu0
    %v1010 = vpop.f32.mrb[0].mxu0
    %v1011 = vadd.f32 0.0, %v1010
    %v1012 = vpop.f32.mrb[0].mxu0
    %1013 = vmatprep.mubr.bf16.mxu0 0
    %1014 = vmatmul.mubr.bf16.gmra.mrb[0].mxu0 %v940
    %v1015 = vpop.f32.mrb[0].mxu0
    %v1016 = vadd.f32 0.0, %v1015
    %v1017 = vpop.f32.mrb[0].mxu0
    %v1018 = vpop.f32.mrb[0].mxu0
    %v1019 = vadd.f32 0.0, %v1018
    %v1020 = vpop.f32.mrb[0].mxu0
    %1021 = vmatprep.mubr.bf16.mxu0 0
    %1022 = vmatmul.mubr.bf16.gmra.mrb[0].mxu0 %v943
    %v1023 = vpop.f32.mrb[0].mxu0
    %v1024 = vadd.f32 0.0, %v1023
    %v1025 = vpop.f32.mrb[0].mxu0
    %v1026 = vpop.f32.mrb[0].mxu0
    %v1027 = vadd.f32 0.0, %v1026
    %v1028 = vpop.f32.mrb[0].mxu0
    %1029 = vmatprep.mubr.bf16.mxu0 0
    %1030 = vmatmul.mubr.bf16.gmra.mrb[0].mxu0 %v946
    %v1031 = vpop.f32.mrb[0].mxu0
    %v1032 = vadd.f32 0.0, %v1031
    %v1033 = vpop.f32.mrb[0].mxu0
    %v1034 = vpop.f32.mrb[0].mxu0
    %v1035 = vadd.f32 0.0, %v1034
    %v1036 = vpop.f32.mrb[0].mxu0
    %1037 = vmatprep.mubr.bf16.mxu0 0
    %1038 = vmatmul.mubr.bf16.gmra.mrb[0].mxu0 %v949
    %v1039 = vpop.f32.mrb[0].mxu0
    %v1040 = vadd.f32 0.0, %v1039
    %v1041 = vpop.f32.mrb[0].mxu0
    %v1042 = vpop.f32.mrb[0].mxu0
    %v1043 = vadd.f32 0.0, %v1042
    %v1044 = vpop.f32.mrb[0].mxu0
    %1045 = vmatprep.mubr.bf16.mxu0 0
    %1046 = vmatmul.mubr.bf16.gmra.mrb[0].mxu0 %v952
    %v1047 = vpop.f32.mrb[0].mxu0
    %v1048 = vadd.f32 0.0, %v1047
    %v1049 = vpop.f32.mrb[0].mxu0
    %v1050 = vpop.f32.mrb[0].mxu0
    %v1051 = vadd.f32 0.0, %v1050
    %v1052 = vpop.f32.mrb[0].mxu0
    %1053 = vdwg.mxu0
    %v1054 = vunpack.c.l.bf16 %v152
    %v1055 = vunpack.c.l.bf16 %v153
    %v1056 = vunpack.c.l.bf16 %v154
    %v1057 = vunpack.c.l.bf16 %v155
    %v1058 = vunpack.c.l.bf16 %v156
    %v1059 = vunpack.c.l.bf16 %v157
    %v1060 = vunpack.c.l.bf16 %v158
    %v1061 = vunpack.c.l.bf16 %v159
    %v1062 = vunpack.c.l.bf16 %v160
    %v1063 = vunpack.c.l.bf16 %v161
    %v1064 = vunpack.c.l.bf16 %v162
    %v1065 = vunpack.c.l.bf16 %v163
    %v1066 = vunpack.c.l.bf16 %v164
    %v1067 = vunpack.c.l.bf16 %v165
    %v1068 = vunpack.c.l.bf16 %v166
    %v1069 = vunpack.c.l.bf16 %v167
    %v1070 = vmul.f32 %v852, %v1054
    %v1071 = vmul.f32 %v855, %v1055
    %v1072 = vmul.f32 %v860, %v1056
    %v1073 = vmul.f32 %v863, %v1057
    %v1074 = vmul.f32 %v868, %v1058
    %v1075 = vmul.f32 %v871, %v1059
    %v1076 = vmul.f32 %v876, %v1060
    %v1077 = vmul.f32 %v879, %v1061
    %v1078 = vmul.f32 %v884, %v1062
    %v1079 = vmul.f32 %v887, %v1063
    %v1080 = vmul.f32 %v892, %v1064
    %v1081 = vmul.f32 %v895, %v1065
    %v1082 = vmul.f32 %v900, %v1066
    %v1083 = vmul.f32 %v903, %v1067
    %v1084 = vmul.f32 %v908, %v1068
    %v1085 = vmul.f32 %v911, %v1069
    %v1086 = vmul.f32 %v992, %v1054
    %v1087 = vmul.f32 %v995, %v1055
    %v1088 = vmul.f32 %v1000, %v1056
    %v1089 = vmul.f32 %v1003, %v1057
    %v1090 = vmul.f32 %v1008, %v1058
    %v1091 = vmul.f32 %v1011, %v1059
    %v1092 = vmul.f32 %v1016, %v1060
    %v1093 = vmul.f32 %v1019, %v1061
    %v1094 = vmul.f32 %v1024, %v1062
    %v1095 = vmul.f32 %v1027, %v1063
    %v1096 = vmul.f32 %v1032, %v1064
    %v1097 = vmul.f32 %v1035, %v1065
    %v1098 = vmul.f32 %v1040, %v1066
    %v1099 = vmul.f32 %v1043, %v1067
    %v1100 = vmul.f32 %v1048, %v1068
    %v1101 = vmul.f32 %v1051, %v1069
    %v1102 = vpack.c.bf16 %v1071, %v1070
    %v1103 = vpack.c.bf16 %v1073, %v1072
    %v1104 = vpack.c.bf16 %v1075, %v1074
    %v1105 = vpack.c.bf16 %v1077, %v1076
    %v1106 = vpack.c.bf16 %v1079, %v1078
    %v1107 = vpack.c.bf16 %v1081, %v1080
    %v1108 = vpack.c.bf16 %v1083, %v1082
    %v1109 = vpack.c.bf16 %v1085, %v1084
    %v1110 = vpack.c.bf16 %v1087, %v1086
    %v1111 = vpack.c.bf16 %v1089, %v1088
    %v1112 = vpack.c.bf16 %v1091, %v1090
    %v1113 = vpack.c.bf16 %v1093, %v1092
    %v1114 = vpack.c.bf16 %v1095, %v1094
    %v1115 = vpack.c.bf16 %v1097, %v1096
    %v1116 = vpack.c.bf16 %v1099, %v1098
    %v1117 = vpack.c.bf16 %v1101, %v1100
    %1118 = vmatprep.subr.bf16.mxu0 0
    %1119 = vmatpush1.bf16.msra.mxu0 %v1102
    %1120 = vmatprep.subr.bf16.mxu0 0
    %1121 = vmatpush1.bf16.msra.mxu0 %v1103
    %1122 = vmatprep.subr.bf16.mxu0 0
    %1123 = vmatpush1.bf16.msra.mxu0 %v1104
    %1124 = vmatprep.subr.bf16.mxu0 0
    %1125 = vmatpush1.bf16.msra.mxu0 %v1105
    %1126 = vmatprep.subr.bf16.mxu0 0
    %1127 = vmatpush1.bf16.msra.mxu0 %v1106
    %1128 = vmatprep.subr.bf16.mxu0 0
    %1129 = vmatpush1.bf16.msra.mxu0 %v1107
    %1130 = vmatprep.subr.bf16.mxu0 0
    %1131 = vmatpush1.bf16.msra.mxu0 %v1108
    %1132 = vmatprep.subr.bf16.mxu0 0
    %1133 = vmatpush1.bf16.msra.mxu0 %v1109
    %1134 = vmatprep.subr.bf16.mxu0 0
    %1135 = vmatpush1.bf16.msra.mxu0 0
    %1136 = vmatprep.subr.bf16.mxu0 0
    %1137 = vmatpush1.bf16.msra.mxu0 0
    %1138 = vmatprep.subr.bf16.mxu0 0
    %1139 = vmatpush1.bf16.msra.mxu0 0
    %1140 = vmatprep.subr.bf16.mxu0 0
    %1141 = vmatpush1.bf16.msra.mxu0 0
    %1142 = vmatprep.subr.bf16.mxu0 0
    %1143 = vmatpush1.bf16.msra.mxu0 0
    %1144 = vmatprep.subr.bf16.mxu0 0
    %1145 = vmatpush1.bf16.msra.mxu0 0
    %1146 = vmatprep.subr.bf16.mxu0 0
    %1147 = vmatpush1.bf16.msra.mxu0 0
    %1148 = vmatprep.subr.bf16.mxu0 0
    %1149 = vmatpush1.bf16.msra.mxu0 0
    %1150 = vmatprep.mubr.bf16.mxu0 0
    %1151 = vmatmul.mubr.bf16.gmra.mrb[0].mxu0 %v755
    %v1152 = vpop.f32.mrb[0].mxu0
    %v1153 = vadd.f32 0.0, %v1152
    %v1154 = vpop.f32.mrb[0].mxu0
    %v1155 = vpop.f32.mrb[0].mxu0
    %v1156 = vpop.f32.mrb[0].mxu0
    %1157 = vdwg.mxu0
    %1158 = vmatprep.subr.bf16.mxu0 0
    %1159 = vmatpush1.bf16.msra.mxu0 %v1110
    %1160 = vmatprep.subr.bf16.mxu0 0
    %1161 = vmatpush1.bf16.msra.mxu0 %v1111
    %1162 = vmatprep.subr.bf16.mxu0 0
    %1163 = vmatpush1.bf16.msra.mxu0 %v1112
    %1164 = vmatprep.subr.bf16.mxu0 0
    %1165 = vmatpush1.bf16.msra.mxu0 %v1113
    %1166 = vmatprep.subr.bf16.mxu0 0
    %1167 = vmatpush1.bf16.msra.mxu0 %v1114
    %1168 = vmatprep.subr.bf16.mxu0 0
    %1169 = vmatpush1.bf16.msra.mxu0 %v1115
    %1170 = vmatprep.subr.bf16.mxu0 0
    %1171 = vmatpush1.bf16.msra.mxu0 %v1116
    %1172 = vmatprep.subr.bf16.mxu0 0
    %1173 = vmatpush1.bf16.msra.mxu0 %v1117
    %1174 = vmatprep.subr.bf16.mxu0 0
    %1175 = vmatpush1.bf16.msra.mxu0 0
    %1176 = vmatprep.subr.bf16.mxu0 0
    %1177 = vmatpush1.bf16.msra.mxu0 0
    %1178 = vmatprep.subr.bf16.mxu0 0
    %1179 = vmatpush1.bf16.msra.mxu0 0
    %1180 = vmatprep.subr.bf16.mxu0 0
    %1181 = vmatpush1.bf16.msra.mxu0 0
    %1182 = vmatprep.subr.bf16.mxu0 0
    %1183 = vmatpush1.bf16.msra.mxu0 0
    %1184 = vmatprep.subr.bf16.mxu0 0
    %1185 = vmatpush1.bf16.msra.mxu0 0
    %1186 = vmatprep.subr.bf16.mxu0 0
    %1187 = vmatpush1.bf16.msra.mxu0 0
    %1188 = vmatprep.subr.bf16.mxu0 0
    %1189 = vmatpush1.bf16.msra.mxu0 0
    %1190 = vmatprep.mubr.bf16.mxu0 0
    %1191 = vmatmul.mubr.bf16.gmra.mrb[0].mxu0 %v756
    %v1192 = vpop.f32.mrb[0].mxu0
    %v1193 = vadd.f32 0.0, %v1192
    %v1194 = vpop.f32.mrb[0].mxu0
    %v1195 = vpop.f32.mrb[0].mxu0
    %v1196 = vpop.f32.mrb[0].mxu0
    %1197 = vdwg.mxu0
    %v1198 = vpack.c.bf16 %v1193, %v1153
    %v1199 = vld [vmem:[#allocation8] sm:$0xf]
    %v1200 = vld [vmem:[#allocation8 + $0x4] sm:$0xf]
    %v1201 = vld [vmem:[#allocation8 + $0x8] sm:$0xf]
    %v1202 = vld [vmem:[#allocation8 + $0xc] sm:$0xf]
    %v1203 = vld [vmem:[#allocation8 + $0x10] sm:$0xf]
    %v1204 = vld [vmem:[#allocation8 + $0x14] sm:$0xf]
    %v1205 = vld [vmem:[#allocation8 + $0x18] sm:$0xf]
    %v1206 = vld [vmem:[#allocation8 + $0x1c] sm:$0xf]
    %v1207 = vld [vmem:[#allocation8 + $0x20] sm:$0xf]
    %v1208 = vld [vmem:[#allocation8 + $0x24] sm:$0xf]
    %v1209 = vld [vmem:[#allocation8 + $0x28] sm:$0xf]
    %v1210 = vld [vmem:[#allocation8 + $0x2c] sm:$0xf]
    %v1211 = vld [vmem:[#allocation8 + $0x30] sm:$0xf]
    %v1212 = vld [vmem:[#allocation8 + $0x34] sm:$0xf]
    %v1213 = vld [vmem:[#allocation8 + $0x38] sm:$0xf]
    %v1214 = vld [vmem:[#allocation8 + $0x3c] sm:$0xf]
    %v1215 = vlaneseq
    %v1216 = vshrl.u32 %v1215, 7
    %v1217 = vsub.s32 0, %v1216
    %v1218 = vrot.slane %v169, %v1217
    %v1235 = vunpack.c.l.b16 %v1199
    %v1236 = vunpack.c.l.b16 %v1200
    %v1237 = vunpack.c.l.b16 %v1201
    %v1238 = vunpack.c.l.b16 %v1202
    %v1239 = vunpack.c.l.b16 %v1203
    %v1240 = vunpack.c.l.b16 %v1204
    %v1241 = vunpack.c.l.b16 %v1205
    %v1242 = vunpack.c.l.b16 %v1206
    %v1243 = vunpack.c.l.b16 %v1207
    %v1244 = vunpack.c.l.b16 %v1208
    %v1245 = vunpack.c.l.b16 %v1209
    %v1246 = vunpack.c.l.b16 %v1210
    %v1247 = vunpack.c.l.b16 %v1211
    %v1248 = vunpack.c.l.b16 %v1212
    %v1249 = vunpack.c.l.b16 %v1213
    %v1250 = vunpack.c.l.b16 %v1214
    %v1251 = vpack.c.b16 %v1236, %v1235
    %v1252 = vpack.c.b16 %v1238, %v1237
    %v1253 = vpack.c.b16 %v1240, %v1239
    %v1254 = vpack.c.b16 %v1242, %v1241
    %v1255 = vpack.c.b16 %v1244, %v1243
    %v1256 = vpack.c.b16 %v1246, %v1245
    %v1257 = vpack.c.b16 %v1248, %v1247
    %v1258 = vpack.c.b16 %v1250, %v1249
    %1267 = vmatprep.subr.bf16.mxu0 0
    %1268 = vmatpush1.bf16.msra.mxu0 %v1251
    %1269 = vmatprep.subr.bf16.mxu0 0
    %1270 = vmatpush1.bf16.msra.mxu0 %v1252
    %1271 = vmatprep.subr.bf16.mxu0 0
    %1272 = vmatpush1.bf16.msra.mxu0 %v1253
    %1273 = vmatprep.subr.bf16.mxu0 0
    %1274 = vmatpush1.bf16.msra.mxu0 %v1254
    %1275 = vmatprep.subr.bf16.mxu0 0
    %1276 = vmatpush1.bf16.msra.mxu0 %v1255
    %1277 = vmatprep.subr.bf16.mxu0 0
    %1278 = vmatpush1.bf16.msra.mxu0 %v1256
    %1279 = vmatprep.subr.bf16.mxu0 0
    %1280 = vmatpush1.bf16.msra.mxu0 %v1257
    %1281 = vmatprep.subr.bf16.mxu0 0
    %1282 = vmatpush1.bf16.msra.mxu0 %v1258
    %1283 = vmatprep.subr.bf16.mxu0 0
    %1284 = vmatpush1.bf16.msra.mxu0 0
    %1285 = vmatprep.subr.bf16.mxu0 0
    %1286 = vmatpush1.bf16.msra.mxu0 0
    %1287 = vmatprep.subr.bf16.mxu0 0
    %1288 = vmatpush1.bf16.msra.mxu0 0
    %1289 = vmatprep.subr.bf16.mxu0 0
    %1290 = vmatpush1.bf16.msra.mxu0 0
    %1291 = vmatprep.subr.bf16.mxu0 0
    %1292 = vmatpush1.bf16.msra.mxu0 0
    %1293 = vmatprep.subr.bf16.mxu0 0
    %1294 = vmatpush1.bf16.msra.mxu0 0
    %1295 = vmatprep.subr.bf16.mxu0 0
    %1296 = vmatpush1.bf16.msra.mxu0 0
    %1297 = vmatprep.subr.bf16.mxu0 0
    %1298 = vmatpush1.bf16.msra.mxu0 0
    %1299 = vmatprep.mubr.bf16.mxu0 0
    %1300 = vmatmul.mubr.bf16.gmra.mrb[0].mxu0 %v1198
    %v1301 = vpop.f32.mrb[0].mxu0
    %v1302 = vadd.f32 %v1218, %v1301
    %v1303 = vpop.f32.mrb[0].mxu0
    %v1304 = vpop.f32.mrb[0].mxu0
    %v1305 = vadd.f32 %v1218, %v1304
    %v1306 = vpop.f32.mrb[0].mxu0
    %1307 = vdwg.mxu0
    %v1308 = vadd.f32 %v1302, %v149
    %v1309 = vadd.f32 %v1305, %v150
    %1310 = vadd.xlane.f32.xlu0 %v1308
    %v1311 = vpop.xlane.xlu0 %1310
    %1312 = vadd.xlane.f32.xlu0 %v1309
    %v1313 = vpop.xlane.xlu0 %1312
    %v1314 = vrcp.pop 128.0
    %v1315 = vmul.f32 %v1311, %v1314
    %v1316 = vmul.f32 %v1313, %v1314
    %v1317 = vsub.f32 %v1308, %v1315
    %v1318 = vsub.f32 %v1309, %v1316
    %v1319 = vmul.f32 %v1317, %v1317
    %v1320 = vmul.f32 %v1318, %v1318
    %1321 = vadd.xlane.f32.xlu0 %v1319
    %v1322 = vpop.xlane.xlu0 %1321
    %1323 = vadd.xlane.f32.xlu0 %v1320
    %v1324 = vpop.xlane.xlu0 %1323
    %v1325 = vmul.f32 %v1322, %v1314
    %v1326 = vmul.f32 %v1324, %v1314
    %v1327 = vadd.f32 %v1325, 1e-12
    %v1328 = vadd.f32 %v1326, 1e-12
    %v1329 = vrsqrt.pop %v1327
    %v1330 = vrsqrt.pop %v1328
    %v1331 = vmul.f32 %v1317, %v1329
    %v1332 = vmul.f32 %v1318, %v1330
    %v1333 = vlaneseq
    %v1334 = vshrl.u32 %v1333, 7
    %v1335 = vsub.s32 1, %v1334
    %v1336 = vrot.slane %v169, %v1335
    %v1337 = vmul.f32 %v1331, %v1336
    %v1338 = vmul.f32 %v1332, %v1336
    %v1339 = vlaneseq
    %v1340 = vshrl.u32 %v1339, 7
    %v1341 = vsub.s32 2, %v1340
    %v1342 = vrot.slane %v169, %v1341
    %v1343 = vadd.f32 %v1337, %v1342
    %v1344 = vadd.f32 %v1338, %v1342
    %v1345 = vmax.f32 %v570, 0.0
    %v1346 = vmax.f32 %v611, 0.0
    %v1347 = vmax.f32 %v574, 0.0
    %v1348 = vmax.f32 %v615, 0.0
    %v1349 = vpack.c.bf16 %v1347, %v1345
    %v1350 = vpack.c.bf16 %v1348, %v1346
    %v1351 = vld [vmem:[#allocation11] sm:$0xff]
    %v1352 = vld [vmem:[#allocation11 + $0x8] sm:$0xff]
    %v1353 = vld [vmem:[#allocation11 + $0x10] sm:$0xff]
    %v1354 = vld [vmem:[#allocation11 + $0x18] sm:$0xff]
    %v1355 = vld [vmem:[#allocation11 + $0x20] sm:$0xff]
    %v1356 = vld [vmem:[#allocation11 + $0x28] sm:$0xff]
    %v1357 = vld [vmem:[#allocation11 + $0x30] sm:$0xff]
    %v1358 = vld [vmem:[#allocation11 + $0x38] sm:$0xff]
    %v1359 = vld [vmem:[#allocation11 + $0x40] sm:$0xff]
    %v1360 = vld [vmem:[#allocation11 + $0x48] sm:$0xff]
    %v1361 = vld [vmem:[#allocation11 + $0x50] sm:$0xff]
    %v1362 = vld [vmem:[#allocation11 + $0x58] sm:$0xff]
    %v1363 = vld [vmem:[#allocation11 + $0x60] sm:$0xff]
    %v1364 = vld [vmem:[#allocation11 + $0x68] sm:$0xff]
    %v1365 = vld [vmem:[#allocation11 + $0x70] sm:$0xff]
    %v1366 = vld [vmem:[#allocation11 + $0x78] sm:$0xff]
    %v1367 = vld [vmem:[#allocation11 + $0x80] sm:$0xff]
    %v1368 = vld [vmem:[#allocation11 + $0x88] sm:$0xff]
    %v1369 = vld [vmem:[#allocation11 + $0x90] sm:$0xff]
    %v1370 = vld [vmem:[#allocation11 + $0x98] sm:$0xff]
    %v1371 = vld [vmem:[#allocation11 + $0xa0] sm:$0xff]
    %v1372 = vld [vmem:[#allocation11 + $0xa8] sm:$0xff]
    %v1373 = vld [vmem:[#allocation11 + $0xb0] sm:$0xff]
    %v1374 = vld [vmem:[#allocation11 + $0xb8] sm:$0xff]
    %v1375 = vld [vmem:[#allocation11 + $0xc0] sm:$0xff]
    %v1376 = vld [vmem:[#allocation11 + $0xc8] sm:$0xff]
    %v1377 = vld [vmem:[#allocation11 + $0xd0] sm:$0xff]
    %v1378 = vld [vmem:[#allocation11 + $0xd8] sm:$0xff]
    %v1379 = vld [vmem:[#allocation11 + $0xe0] sm:$0xff]
    %v1380 = vld [vmem:[#allocation11 + $0xe8] sm:$0xff]
    %v1381 = vld [vmem:[#allocation11 + $0xf0] sm:$0xff]
    %v1382 = vld [vmem:[#allocation11 + $0xf8] sm:$0xff]
    %v1384 = vlaneseq
    %v1385 = vshrl.u32 %v1384, 7
    %v1386 = vsub.s32 1, %v1385
    %v1387 = vrot.slane %v170, %v1386
    %v1388 = vlaneseq
    %v1389 = vshrl.u32 %v1388, 7
    %v1390 = vsub.s32 3, %v1389
    %v1391 = vrot.slane %v170, %v1390
    %v1394 = vlaneseq
    %v1395 = vshrl.u32 %v1394, 7
    %v1396 = vsub.s32 1, %v1395
    %v1397 = vrot.slane %v1387, %v1396
    %v1398 = vlaneseq
    %v1399 = vshrl.u32 %v1398, 7
    %v1400 = vsub.s32 1, %v1399
    %v1401 = vrot.slane %v1391, %v1400
    %v1434 = vunpack.c.l.b16 %v1351
    %v1435 = vunpack.c.h.b16 %v1351
    %v1436 = vunpack.c.l.b16 %v1352
    %v1437 = vunpack.c.h.b16 %v1352
    %v1438 = vunpack.c.l.b16 %v1353
    %v1439 = vunpack.c.h.b16 %v1353
    %v1440 = vunpack.c.l.b16 %v1354
    %v1441 = vunpack.c.h.b16 %v1354
    %v1442 = vunpack.c.l.b16 %v1355
    %v1443 = vunpack.c.h.b16 %v1355
    %v1444 = vunpack.c.l.b16 %v1356
    %v1445 = vunpack.c.h.b16 %v1356
    %v1446 = vunpack.c.l.b16 %v1357
    %v1447 = vunpack.c.h.b16 %v1357
    %v1448 = vunpack.c.l.b16 %v1358
    %v1449 = vunpack.c.h.b16 %v1358
    %v1450 = vunpack.c.l.b16 %v1359
    %v1451 = vunpack.c.h.b16 %v1359
    %v1452 = vunpack.c.l.b16 %v1360
    %v1453 = vunpack.c.h.b16 %v1360
    %v1454 = vunpack.c.l.b16 %v1361
    %v1455 = vunpack.c.h.b16 %v1361
    %v1456 = vunpack.c.l.b16 %v1362
    %v1457 = vunpack.c.h.b16 %v1362
    %v1458 = vunpack.c.l.b16 %v1363
    %v1459 = vunpack.c.h.b16 %v1363
    %v1460 = vunpack.c.l.b16 %v1364
    %v1461 = vunpack.c.h.b16 %v1364
    %v1462 = vunpack.c.l.b16 %v1365
    %v1463 = vunpack.c.h.b16 %v1365
    %v1464 = vunpack.c.l.b16 %v1366
    %v1465 = vunpack.c.h.b16 %v1366
    %v1466 = vunpack.c.l.b16 %v1367
    %v1467 = vunpack.c.h.b16 %v1367
    %v1468 = vunpack.c.l.b16 %v1368
    %v1469 = vunpack.c.h.b16 %v1368
    %v1470 = vunpack.c.l.b16 %v1369
    %v1471 = vunpack.c.h.b16 %v1369
    %v1472 = vunpack.c.l.b16 %v1370
    %v1473 = vunpack.c.h.b16 %v1370
    %v1474 = vunpack.c.l.b16 %v1371
    %v1475 = vunpack.c.h.b16 %v1371
    %v1476 = vunpack.c.l.b16 %v1372
    %v1477 = vunpack.c.h.b16 %v1372
    %v1478 = vunpack.c.l.b16 %v1373
    %v1479 = vunpack.c.h.b16 %v1373
    %v1480 = vunpack.c.l.b16 %v1374
    %v1481 = vunpack.c.h.b16 %v1374
    %v1482 = vunpack.c.l.b16 %v1375
    %v1483 = vunpack.c.h.b16 %v1375
    %v1484 = vunpack.c.l.b16 %v1376
    %v1485 = vunpack.c.h.b16 %v1376
    %v1486 = vunpack.c.l.b16 %v1377
    %v1487 = vunpack.c.h.b16 %v1377
    %v1488 = vunpack.c.l.b16 %v1378
    %v1489 = vunpack.c.h.b16 %v1378
    %v1490 = vunpack.c.l.b16 %v1379
    %v1491 = vunpack.c.h.b16 %v1379
    %v1492 = vunpack.c.l.b16 %v1380
    %v1493 = vunpack.c.h.b16 %v1380
    %v1494 = vunpack.c.l.b16 %v1381
    %v1495 = vunpack.c.h.b16 %v1381
    %v1496 = vunpack.c.l.b16 %v1382
    %v1497 = vunpack.c.h.b16 %v1382
    %v1498 = vpack.c.b16 %v1436, %v1434
    %v1499 = vpack.c.b16 %v1437, %v1435
    %v1500 = vpack.c.b16 %v1440, %v1438
    %v1501 = vpack.c.b16 %v1441, %v1439
    %v1502 = vpack.c.b16 %v1444, %v1442
    %v1503 = vpack.c.b16 %v1445, %v1443
    %v1504 = vpack.c.b16 %v1448, %v1446
    %v1505 = vpack.c.b16 %v1449, %v1447
    %v1506 = vpack.c.b16 %v1452, %v1450
    %v1507 = vpack.c.b16 %v1453, %v1451
    %v1508 = vpack.c.b16 %v1456, %v1454
    %v1509 = vpack.c.b16 %v1457, %v1455
    %v1510 = vpack.c.b16 %v1460, %v1458
    %v1511 = vpack.c.b16 %v1461, %v1459
    %v1512 = vpack.c.b16 %v1464, %v1462
    %v1513 = vpack.c.b16 %v1465, %v1463
    %v1514 = vpack.c.b16 %v1468, %v1466
    %v1515 = vpack.c.b16 %v1469, %v1467
    %v1516 = vpack.c.b16 %v1472, %v1470
    %v1517 = vpack.c.b16 %v1473, %v1471
    %v1518 = vpack.c.b16 %v1476, %v1474
    %v1519 = vpack.c.b16 %v1477, %v1475
    %v1520 = vpack.c.b16 %v1480, %v1478
    %v1521 = vpack.c.b16 %v1481, %v1479
    %v1522 = vpack.c.b16 %v1484, %v1482
    %v1523 = vpack.c.b16 %v1485, %v1483
    %v1524 = vpack.c.b16 %v1488, %v1486
    %v1525 = vpack.c.b16 %v1489, %v1487
    %v1526 = vpack.c.b16 %v1492, %v1490
    %v1527 = vpack.c.b16 %v1493, %v1491
    %v1528 = vpack.c.b16 %v1496, %v1494
    %v1529 = vpack.c.b16 %v1497, %v1495
    %1562 = vmatprep.subr.bf16.mxu0 %v1499
    %1563 = vmatpush1.bf16.msra.mxu0 %v1498
    %1564 = vmatprep.subr.bf16.mxu0 %v1501
    %1565 = vmatpush1.bf16.msra.mxu0 %v1500
    %1566 = vmatprep.subr.bf16.mxu0 %v1503
    %1567 = vmatpush1.bf16.msra.mxu0 %v1502
    %1568 = vmatprep.subr.bf16.mxu0 %v1505
    %1569 = vmatpush1.bf16.msra.mxu0 %v1504
    %1570 = vmatprep.subr.bf16.mxu0 %v1507
    %1571 = vmatpush1.bf16.msra.mxu0 %v1506
    %1572 = vmatprep.subr.bf16.mxu0 %v1509
    %1573 = vmatpush1.bf16.msra.mxu0 %v1508
    %1574 = vmatprep.subr.bf16.mxu0 %v1511
    %1575 = vmatpush1.bf16.msra.mxu0 %v1510
    %1576 = vmatprep.subr.bf16.mxu0 %v1513
    %1577 = vmatpush1.bf16.msra.mxu0 %v1512
    %1578 = vmatprep.subr.bf16.mxu0 %v1515
    %1579 = vmatpush1.bf16.msra.mxu0 %v1514
    %1580 = vmatprep.subr.bf16.mxu0 %v1517
    %1581 = vmatpush1.bf16.msra.mxu0 %v1516
    %1582 = vmatprep.subr.bf16.mxu0 %v1519
    %1583 = vmatpush1.bf16.msra.mxu0 %v1518
    %1584 = vmatprep.subr.bf16.mxu0 %v1521
    %1585 = vmatpush1.bf16.msra.mxu0 %v1520
    %1586 = vmatprep.subr.bf16.mxu0 %v1523
    %1587 = vmatpush1.bf16.msra.mxu0 %v1522
    %1588 = vmatprep.subr.bf16.mxu0 %v1525
    %1589 = vmatpush1.bf16.msra.mxu0 %v1524
    %1590 = vmatprep.subr.bf16.mxu0 %v1527
    %1591 = vmatpush1.bf16.msra.mxu0 %v1526
    %1592 = vmatprep.subr.bf16.mxu0 %v1529
    %1593 = vmatpush1.bf16.msra.mxu0 %v1528
    %1594 = vmatprep.mubr.bf16.mxu0 %v1350
    %1595 = vmatmul.mubr.bf16.gmra.mrb[0].mxu0 %v1349
    %v1596 = vpop.f32.mrb[0].mxu0
    %v1597 = vadd.f32 %v1397, %v1596
    %v1598 = vpop.f32.mrb[0].mxu0
    %v1599 = vadd.f32 %v1401, %v1598
    %v1600 = vpop.f32.mrb[0].mxu0
    %v1601 = vadd.f32 %v1397, %v1600
    %v1602 = vpop.f32.mrb[0].mxu0
    %v1603 = vadd.f32 %v1401, %v1602
    %1604 = vdwg.mxu0
    %v1605 = vxor.u32 %v1597, 2147483648
    %v1606 = vxor.u32 %v1599, 2147483648
    %v1607 = vxor.u32 %v1601, 2147483648
    %v1608 = vxor.u32 %v1603, 2147483648
    %v1609 = vmul.f32 %v1605, 1.442695
    %v1610 = vpow.pop %v1609
    %v1611 = vmul.f32 %v1606, 1.442695
    %v1612 = vpow.pop %v1611
    %v1613 = vmul.f32 %v1607, 1.442695
    %v1614 = vpow.pop %v1613
    %v1615 = vmul.f32 %v1608, 1.442695
    %v1616 = vpow.pop %v1615
    %v1617 = vadd.f32 %v1610, 1.0
    %v1618 = vadd.f32 %v1612, 1.0
    %v1619 = vadd.f32 %v1614, 1.0
    %v1620 = vadd.f32 %v1616, 1.0
    %v1621 = vrcp.pop %v1617
    %v1622 = vmul.f32 1.0, %v1621
    %v1623 = vrcp.pop %v1618
    %v1624 = vmul.f32 1.0, %v1623
    %v1625 = vrcp.pop %v1619
    %v1626 = vmul.f32 1.0, %v1625
    %v1627 = vrcp.pop %v1620
    %v1628 = vmul.f32 1.0, %v1627
    %v1629 = vpack.c.bf16 %v1344, %v1343
    %v1630 = vld [vmem:[#allocation10] sm:$0xff]
    %v1631 = vld [vmem:[#allocation10 + $0x8] sm:$0xff]
    %v1632 = vld [vmem:[#allocation10 + $0x10] sm:$0xff]
    %v1633 = vld [vmem:[#allocation10 + $0x18] sm:$0xff]
    %v1634 = vld [vmem:[#allocation10 + $0x20] sm:$0xff]
    %v1635 = vld [vmem:[#allocation10 + $0x28] sm:$0xff]
    %v1636 = vld [vmem:[#allocation10 + $0x30] sm:$0xff]
    %v1637 = vld [vmem:[#allocation10 + $0x38] sm:$0xff]
    %v1638 = vld [vmem:[#allocation10 + $0x40] sm:$0xff]
    %v1639 = vld [vmem:[#allocation10 + $0x48] sm:$0xff]
    %v1640 = vld [vmem:[#allocation10 + $0x50] sm:$0xff]
    %v1641 = vld [vmem:[#allocation10 + $0x58] sm:$0xff]
    %v1642 = vld [vmem:[#allocation10 + $0x60] sm:$0xff]
    %v1643 = vld [vmem:[#allocation10 + $0x68] sm:$0xff]
    %v1644 = vld [vmem:[#allocation10 + $0x70] sm:$0xff]
    %v1645 = vld [vmem:[#allocation10 + $0x78] sm:$0xff]
    %v1646 = vlaneseq
    %v1647 = vshrl.u32 %v1646, 7
    %v1648 = vsub.s32 0, %v1647
    %v1649 = vrot.slane %v170, %v1648
    %v1650 = vlaneseq
    %v1651 = vshrl.u32 %v1650, 7
    %v1652 = vsub.s32 2, %v1651
    %v1653 = vrot.slane %v170, %v1652
    %v1656 = vlaneseq
    %v1657 = vshrl.u32 %v1656, 7
    %v1658 = vsub.s32 0, %v1657
    %v1659 = vrot.slane %v1649, %v1658
    %v1660 = vlaneseq
    %v1661 = vshrl.u32 %v1660, 7
    %v1662 = vsub.s32 0, %v1661
    %v1663 = vrot.slane %v1653, %v1662
    %v1680 = vunpack.c.l.b16 %v1630
    %v1681 = vunpack.c.h.b16 %v1630
    %v1682 = vunpack.c.l.b16 %v1631
    %v1683 = vunpack.c.h.b16 %v1631
    %v1684 = vunpack.c.l.b16 %v1632
    %v1685 = vunpack.c.h.b16 %v1632
    %v1686 = vunpack.c.l.b16 %v1633
    %v1687 = vunpack.c.h.b16 %v1633
    %v1688 = vunpack.c.l.b16 %v1634
    %v1689 = vunpack.c.h.b16 %v1634
    %v1690 = vunpack.c.l.b16 %v1635
    %v1691 = vunpack.c.h.b16 %v1635
    %v1692 = vunpack.c.l.b16 %v1636
    %v1693 = vunpack.c.h.b16 %v1636
    %v1694 = vunpack.c.l.b16 %v1637
    %v1695 = vunpack.c.h.b16 %v1637
    %v1696 = vunpack.c.l.b16 %v1638
    %v1697 = vunpack.c.h.b16 %v1638
    %v1698 = vunpack.c.l.b16 %v1639
    %v1699 = vunpack.c.h.b16 %v1639
    %v1700 = vunpack.c.l.b16 %v1640
    %v1701 = vunpack.c.h.b16 %v1640
    %v1702 = vunpack.c.l.b16 %v1641
    %v1703 = vunpack.c.h.b16 %v1641
    %v1704 = vunpack.c.l.b16 %v1642
    %v1705 = vunpack.c.h.b16 %v1642
    %v1706 = vunpack.c.l.b16 %v1643
    %v1707 = vunpack.c.h.b16 %v1643
    %v1708 = vunpack.c.l.b16 %v1644
    %v1709 = vunpack.c.h.b16 %v1644
    %v1710 = vunpack.c.l.b16 %v1645
    %v1711 = vunpack.c.h.b16 %v1645
    %v1712 = vpack.c.b16 %v1682, %v1680
    %v1713 = vpack.c.b16 %v1683, %v1681
    %v1714 = vpack.c.b16 %v1686, %v1684
    %v1715 = vpack.c.b16 %v1687, %v1685
    %v1716 = vpack.c.b16 %v1690, %v1688
    %v1717 = vpack.c.b16 %v1691, %v1689
    %v1718 = vpack.c.b16 %v1694, %v1692
    %v1719 = vpack.c.b16 %v1695, %v1693
    %v1720 = vpack.c.b16 %v1698, %v1696
    %v1721 = vpack.c.b16 %v1699, %v1697
    %v1722 = vpack.c.b16 %v1702, %v1700
    %v1723 = vpack.c.b16 %v1703, %v1701
    %v1724 = vpack.c.b16 %v1706, %v1704
    %v1725 = vpack.c.b16 %v1707, %v1705
    %v1726 = vpack.c.b16 %v1710, %v1708
    %v1727 = vpack.c.b16 %v1711, %v1709
    %1744 = vmatprep.subr.bf16.mxu0 %v1713
    %1745 = vmatpush1.bf16.msra.mxu0 %v1712
    %1746 = vmatprep.subr.bf16.mxu0 %v1715
    %1747 = vmatpush1.bf16.msra.mxu0 %v1714
    %1748 = vmatprep.subr.bf16.mxu0 %v1717
    %1749 = vmatpush1.bf16.msra.mxu0 %v1716
    %1750 = vmatprep.subr.bf16.mxu0 %v1719
    %1751 = vmatpush1.bf16.msra.mxu0 %v1718
    %1752 = vmatprep.subr.bf16.mxu0 %v1721
    %1753 = vmatpush1.bf16.msra.mxu0 %v1720
    %1754 = vmatprep.subr.bf16.mxu0 %v1723
    %1755 = vmatpush1.bf16.msra.mxu0 %v1722
    %1756 = vmatprep.subr.bf16.mxu0 %v1725
    %1757 = vmatpush1.bf16.msra.mxu0 %v1724
    %1758 = vmatprep.subr.bf16.mxu0 %v1727
    %1759 = vmatpush1.bf16.msra.mxu0 %v1726
    %1760 = vmatprep.subr.bf16.mxu0 0
    %1761 = vmatpush1.bf16.msra.mxu0 0
    %1762 = vmatprep.subr.bf16.mxu0 0
    %1763 = vmatpush1.bf16.msra.mxu0 0
    %1764 = vmatprep.subr.bf16.mxu0 0
    %1765 = vmatpush1.bf16.msra.mxu0 0
    %1766 = vmatprep.subr.bf16.mxu0 0
    %1767 = vmatpush1.bf16.msra.mxu0 0
    %1768 = vmatprep.subr.bf16.mxu0 0
    %1769 = vmatpush1.bf16.msra.mxu0 0
    %1770 = vmatprep.subr.bf16.mxu0 0
    %1771 = vmatpush1.bf16.msra.mxu0 0
    %1772 = vmatprep.subr.bf16.mxu0 0
    %1773 = vmatpush1.bf16.msra.mxu0 0
    %1774 = vmatprep.subr.bf16.mxu0 0
    %1775 = vmatpush1.bf16.msra.mxu0 0
    %1776 = vmatprep.mubr.bf16.mxu0 0
    %1777 = vmatmul.mubr.bf16.gmra.mrb[0].mxu0 %v1629
    %v1778 = vpop.f32.mrb[0].mxu0
    %v1779 = vadd.f32 %v1659, %v1778
    %v1780 = vpop.f32.mrb[0].mxu0
    %v1781 = vadd.f32 %v1663, %v1780
    %v1782 = vpop.f32.mrb[0].mxu0
    %v1783 = vadd.f32 %v1659, %v1782
    %v1784 = vpop.f32.mrb[0].mxu0
    %v1785 = vadd.f32 %v1663, %v1784
    %1786 = vdwg.mxu0
    %v1787 = vmul.f32 %v1779, %v1622
    %v1788 = vmul.f32 %v1781, %v1624
    %v1789 = vmul.f32 %v1783, %v1626
    %v1790 = vmul.f32 %v1785, %v1628
    %v1791 = vmul.f32 %v1787, 0.5
    %v1792 = vmul.f32 %v1788, 0.5
    %v1793 = vmul.f32 %v1789, 0.5
    %v1794 = vmul.f32 %v1790, 0.5
    %v1795 = vrcp.pop 1.4142135
    %v1796 = vmul.f32 %v1787, %v1795
    %v1797 = vmul.f32 %v1788, %v1795
    %v1798 = vmul.f32 %v1789, %v1795
    %v1799 = vmul.f32 %v1790, %v1795
    %v1800 = verf.f32.pop %v1796
    %v1801 = verf.f32.pop %v1797
    %v1802 = verf.f32.pop %v1798
    %v1803 = verf.f32.pop %v1799
    %v1804 = vadd.f32 %v1800, 1.0
    %v1805 = vadd.f32 %v1801, 1.0
    %v1806 = vadd.f32 %v1802, 1.0
    %v1807 = vadd.f32 %v1803, 1.0
    %v1808 = vmul.f32 %v1791, %v1804
    %v1809 = vmul.f32 %v1792, %v1805
    %v1810 = vmul.f32 %v1793, %v1806
    %v1811 = vmul.f32 %v1794, %v1807
    %v1812 = vmax.f32 %v613, 0.0
    %v1813 = vmax.f32 %v617, 0.0
    %v1814 = vpack.c.bf16 %v1813, %v1812
    %v1815 = vld [vmem:[#allocation14] sm:$0xf]
    %v1816 = vld [vmem:[#allocation14 + $0x4] sm:$0xf]
    %v1817 = vld [vmem:[#allocation14 + $0x8] sm:$0xf]
    %v1818 = vld [vmem:[#allocation14 + $0xc] sm:$0xf]
    %v1819 = vld [vmem:[#allocation14 + $0x10] sm:$0xf]
    %v1820 = vld [vmem:[#allocation14 + $0x14] sm:$0xf]
    %v1821 = vld [vmem:[#allocation14 + $0x18] sm:$0xf]
    %v1822 = vld [vmem:[#allocation14 + $0x1c] sm:$0xf]
    %v1823 = vld [vmem:[#allocation14 + $0x20] sm:$0xf]
    %v1824 = vld [vmem:[#allocation14 + $0x24] sm:$0xf]
    %v1825 = vld [vmem:[#allocation14 + $0x28] sm:$0xf]
    %v1826 = vld [vmem:[#allocation14 + $0x2c] sm:$0xf]
    %v1827 = vld [vmem:[#allocation14 + $0x30] sm:$0xf]
    %v1828 = vld [vmem:[#allocation14 + $0x34] sm:$0xf]
    %v1829 = vld [vmem:[#allocation14 + $0x38] sm:$0xf]
    %v1830 = vld [vmem:[#allocation14 + $0x3c] sm:$0xf]
    %v1831 = vlaneseq
    %v1832 = vshrl.u32 %v1831, 7
    %v1833 = vsub.s32 4, %v1832
    %v1834 = vrot.slane %v169, %v1833
    %v1851 = vunpack.c.l.b16 %v1815
    %v1852 = vunpack.c.l.b16 %v1816
    %v1853 = vunpack.c.l.b16 %v1817
    %v1854 = vunpack.c.l.b16 %v1818
    %v1855 = vunpack.c.l.b16 %v1819
    %v1856 = vunpack.c.l.b16 %v1820
    %v1857 = vunpack.c.l.b16 %v1821
    %v1858 = vunpack.c.l.b16 %v1822
    %v1859 = vunpack.c.l.b16 %v1823
    %v1860 = vunpack.c.l.b16 %v1824
    %v1861 = vunpack.c.l.b16 %v1825
    %v1862 = vunpack.c.l.b16 %v1826
    %v1863 = vunpack.c.l.b16 %v1827
    %v1864 = vunpack.c.l.b16 %v1828
    %v1865 = vunpack.c.l.b16 %v1829
    %v1866 = vunpack.c.l.b16 %v1830
    %v1867 = vpack.c.b16 %v1852, %v1851
    %v1868 = vpack.c.b16 %v1854, %v1853
    %v1869 = vpack.c.b16 %v1856, %v1855
    %v1870 = vpack.c.b16 %v1858, %v1857
    %v1871 = vpack.c.b16 %v1860, %v1859
    %v1872 = vpack.c.b16 %v1862, %v1861
    %v1873 = vpack.c.b16 %v1864, %v1863
    %v1874 = vpack.c.b16 %v1866, %v1865
    %1883 = vmatprep.subr.bf16.mxu0 0
    %1884 = vmatpush1.bf16.msra.mxu0 %v1867
    %1885 = vmatprep.subr.bf16.mxu0 0
    %1886 = vmatpush1.bf16.msra.mxu0 %v1868
    %1887 = vmatprep.subr.bf16.mxu0 0
    %1888 = vmatpush1.bf16.msra.mxu0 %v1869
    %1889 = vmatprep.subr.bf16.mxu0 0
    %1890 = vmatpush1.bf16.msra.mxu0 %v1870
    %1891 = vmatprep.subr.bf16.mxu0 0
    %1892 = vmatpush1.bf16.msra.mxu0 %v1871
    %1893 = vmatprep.subr.bf16.mxu0 0
    %1894 = vmatpush1.bf16.msra.mxu0 %v1872
    %1895 = vmatprep.subr.bf16.mxu0 0
    %1896 = vmatpush1.bf16.msra.mxu0 %v1873
    %1897 = vmatprep.subr.bf16.mxu0 0
    %1898 = vmatpush1.bf16.msra.mxu0 %v1874
    %1899 = vmatprep.subr.bf16.mxu0 0
    %1900 = vmatpush1.bf16.msra.mxu0 0
    %1901 = vmatprep.subr.bf16.mxu0 0
    %1902 = vmatpush1.bf16.msra.mxu0 0
    %1903 = vmatprep.subr.bf16.mxu0 0
    %1904 = vmatpush1.bf16.msra.mxu0 0
    %1905 = vmatprep.subr.bf16.mxu0 0
    %1906 = vmatpush1.bf16.msra.mxu0 0
    %1907 = vmatprep.subr.bf16.mxu0 0
    %1908 = vmatpush1.bf16.msra.mxu0 0
    %1909 = vmatprep.subr.bf16.mxu0 0
    %1910 = vmatpush1.bf16.msra.mxu0 0
    %1911 = vmatprep.subr.bf16.mxu0 0
    %1912 = vmatpush1.bf16.msra.mxu0 0
    %1913 = vmatprep.subr.bf16.mxu0 0
    %1914 = vmatpush1.bf16.msra.mxu0 0
    %1915 = vmatprep.mubr.bf16.mxu0 0
    %1916 = vmatmul.mubr.bf16.gmra.mrb[0].mxu0 %v1814
    %v1917 = vpop.f32.mrb[0].mxu0
    %v1918 = vadd.f32 %v1834, %v1917
    %v1919 = vpop.f32.mrb[0].mxu0
    %v1920 = vpop.f32.mrb[0].mxu0
    %v1921 = vadd.f32 %v1834, %v1920
    %v1922 = vpop.f32.mrb[0].mxu0
    %1923 = vdwg.mxu0
    %v1924 = vxor.u32 %v1918, 2147483648
    %v1925 = vxor.u32 %v1921, 2147483648
    %v1926 = vmul.f32 %v1924, 1.442695
    %v1927 = vpow.pop %v1926
    %v1928 = vmul.f32 %v1925, 1.442695
    %v1929 = vpow.pop %v1928
    %v1930 = vadd.f32 %v1927, 1.0
    %v1931 = vadd.f32 %v1929, 1.0
    %v1932 = vrcp.pop %v1930
    %v1933 = vmul.f32 1.0, %v1932
    %v1934 = vrcp.pop %v1931
    %v1935 = vmul.f32 1.0, %v1934
    %v1936 = vpack.c.bf16 %v1810, %v1808
    %v1937 = vpack.c.bf16 %v1811, %v1809
    %v1938 = vld [vmem:[#allocation13] sm:$0xf]
    %v1939 = vld [vmem:[#allocation13 + $0x4] sm:$0xf]
    %v1940 = vld [vmem:[#allocation13 + $0x8] sm:$0xf]
    %v1941 = vld [vmem:[#allocation13 + $0xc] sm:$0xf]
    %v1942 = vld [vmem:[#allocation13 + $0x10] sm:$0xf]
    %v1943 = vld [vmem:[#allocation13 + $0x14] sm:$0xf]
    %v1944 = vld [vmem:[#allocation13 + $0x18] sm:$0xf]
    %v1945 = vld [vmem:[#allocation13 + $0x1c] sm:$0xf]
    %v1946 = vld [vmem:[#allocation13 + $0x20] sm:$0xf]
    %v1947 = vld [vmem:[#allocation13 + $0x24] sm:$0xf]
    %v1948 = vld [vmem:[#allocation13 + $0x28] sm:$0xf]
    %v1949 = vld [vmem:[#allocation13 + $0x2c] sm:$0xf]
    %v1950 = vld [vmem:[#allocation13 + $0x30] sm:$0xf]
    %v1951 = vld [vmem:[#allocation13 + $0x34] sm:$0xf]
    %v1952 = vld [vmem:[#allocation13 + $0x38] sm:$0xf]
    %v1953 = vld [vmem:[#allocation13 + $0x3c] sm:$0xf]
    %v1954 = vld [vmem:[#allocation13 + $0x40] sm:$0xf]
    %v1955 = vld [vmem:[#allocation13 + $0x44] sm:$0xf]
    %v1956 = vld [vmem:[#allocation13 + $0x48] sm:$0xf]
    %v1957 = vld [vmem:[#allocation13 + $0x4c] sm:$0xf]
    %v1958 = vld [vmem:[#allocation13 + $0x50] sm:$0xf]
    %v1959 = vld [vmem:[#allocation13 + $0x54] sm:$0xf]
    %v1960 = vld [vmem:[#allocation13 + $0x58] sm:$0xf]
    %v1961 = vld [vmem:[#allocation13 + $0x5c] sm:$0xf]
    %v1962 = vld [vmem:[#allocation13 + $0x60] sm:$0xf]
    %v1963 = vld [vmem:[#allocation13 + $0x64] sm:$0xf]
    %v1964 = vld [vmem:[#allocation13 + $0x68] sm:$0xf]
    %v1965 = vld [vmem:[#allocation13 + $0x6c] sm:$0xf]
    %v1966 = vld [vmem:[#allocation13 + $0x70] sm:$0xf]
    %v1967 = vld [vmem:[#allocation13 + $0x74] sm:$0xf]
    %v1968 = vld [vmem:[#allocation13 + $0x78] sm:$0xf]
    %v1969 = vld [vmem:[#allocation13 + $0x7c] sm:$0xf]
    %v1970 = vlaneseq
    %v1971 = vshrl.u32 %v1970, 7
    %v1972 = vsub.s32 3, %v1971
    %v1973 = vrot.slane %v169, %v1972
    %v2006 = vunpack.c.l.b16 %v1938
    %v2007 = vunpack.c.l.b16 %v1939
    %v2008 = vunpack.c.l.b16 %v1940
    %v2009 = vunpack.c.l.b16 %v1941
    %v2010 = vunpack.c.l.b16 %v1942
    %v2011 = vunpack.c.l.b16 %v1943
    %v2012 = vunpack.c.l.b16 %v1944
    %v2013 = vunpack.c.l.b16 %v1945
    %v2014 = vunpack.c.l.b16 %v1946
    %v2015 = vunpack.c.l.b16 %v1947
    %v2016 = vunpack.c.l.b16 %v1948
    %v2017 = vunpack.c.l.b16 %v1949
    %v2018 = vunpack.c.l.b16 %v1950
    %v2019 = vunpack.c.l.b16 %v1951
    %v2020 = vunpack.c.l.b16 %v1952
    %v2021 = vunpack.c.l.b16 %v1953
    %v2022 = vunpack.c.l.b16 %v1954
    %v2023 = vunpack.c.l.b16 %v1955
    %v2024 = vunpack.c.l.b16 %v1956
    %v2025 = vunpack.c.l.b16 %v1957
    %v2026 = vunpack.c.l.b16 %v1958
    %v2027 = vunpack.c.l.b16 %v1959
    %v2028 = vunpack.c.l.b16 %v1960
    %v2029 = vunpack.c.l.b16 %v1961
    %v2030 = vunpack.c.l.b16 %v1962
    %v2031 = vunpack.c.l.b16 %v1963
    %v2032 = vunpack.c.l.b16 %v1964
    %v2033 = vunpack.c.l.b16 %v1965
    %v2034 = vunpack.c.l.b16 %v1966
    %v2035 = vunpack.c.l.b16 %v1967
    %v2036 = vunpack.c.l.b16 %v1968
    %v2037 = vunpack.c.l.b16 %v1969
    %v2038 = vpack.c.b16 %v2007, %v2006
    %v2039 = vpack.c.b16 %v2009, %v2008
    %v2040 = vpack.c.b16 %v2011, %v2010
    %v2041 = vpack.c.b16 %v2013, %v2012
    %v2042 = vpack.c.b16 %v2015, %v2014
    %v2043 = vpack.c.b16 %v2017, %v2016
    %v2044 = vpack.c.b16 %v2019, %v2018
    %v2045 = vpack.c.b16 %v2021, %v2020
    %v2046 = vpack.c.b16 %v2023, %v2022
    %v2047 = vpack.c.b16 %v2025, %v2024
    %v2048 = vpack.c.b16 %v2027, %v2026
    %v2049 = vpack.c.b16 %v2029, %v2028
    %v2050 = vpack.c.b16 %v2031, %v2030
    %v2051 = vpack.c.b16 %v2033, %v2032
    %v2052 = vpack.c.b16 %v2035, %v2034
    %v2053 = vpack.c.b16 %v2037, %v2036
    %2070 = vmatprep.subr.bf16.mxu0 0
    %2071 = vmatpush1.bf16.msra.mxu0 %v2038
    %2072 = vmatprep.subr.bf16.mxu0 0
    %2073 = vmatpush1.bf16.msra.mxu0 %v2039
    %2074 = vmatprep.subr.bf16.mxu0 0
    %2075 = vmatpush1.bf16.msra.mxu0 %v2040
    %2076 = vmatprep.subr.bf16.mxu0 0
    %2077 = vmatpush1.bf16.msra.mxu0 %v2041
    %2078 = vmatprep.subr.bf16.mxu0 0
    %2079 = vmatpush1.bf16.msra.mxu0 %v2042
    %2080 = vmatprep.subr.bf16.mxu0 0
    %2081 = vmatpush1.bf16.msra.mxu0 %v2043
    %2082 = vmatprep.subr.bf16.mxu0 0
    %2083 = vmatpush1.bf16.msra.mxu0 %v2044
    %2084 = vmatprep.subr.bf16.mxu0 0
    %2085 = vmatpush1.bf16.msra.mxu0 %v2045
    %2086 = vmatprep.subr.bf16.mxu0 0
    %2087 = vmatpush1.bf16.msra.mxu0 %v2046
    %2088 = vmatprep.subr.bf16.mxu0 0
    %2089 = vmatpush1.bf16.msra.mxu0 %v2047
    %2090 = vmatprep.subr.bf16.mxu0 0
    %2091 = vmatpush1.bf16.msra.mxu0 %v2048
    %2092 = vmatprep.subr.bf16.mxu0 0
    %2093 = vmatpush1.bf16.msra.mxu0 %v2049
    %2094 = vmatprep.subr.bf16.mxu0 0
    %2095 = vmatpush1.bf16.msra.mxu0 %v2050
    %2096 = vmatprep.subr.bf16.mxu0 0
    %2097 = vmatpush1.bf16.msra.mxu0 %v2051
    %2098 = vmatprep.subr.bf16.mxu0 0
    %2099 = vmatpush1.bf16.msra.mxu0 %v2052
    %2100 = vmatprep.subr.bf16.mxu0 0
    %2101 = vmatpush1.bf16.msra.mxu0 %v2053
    %2102 = vmatprep.mubr.bf16.mxu0 %v1937
    %2103 = vmatmul.mubr.bf16.gmra.mrb[0].mxu0 %v1936
    %v2104 = vpop.f32.mrb[0].mxu0
    %v2105 = vadd.f32 %v1973, %v2104
    %v2106 = vpop.f32.mrb[0].mxu0
    %v2107 = vpop.f32.mrb[0].mxu0
    %v2108 = vadd.f32 %v1973, %v2107
    %v2109 = vpop.f32.mrb[0].mxu0
    %2110 = vdwg.mxu0
    %v2111 = vmul.f32 %v2105, %v1933
    %v2112 = vmul.f32 %v2108, %v1935
    %v2113 = vadd.f32 %v2111, %v149
    %v2114 = vadd.f32 %v2112, %v150
    %2115 = vadd.xlane.f32.xlu0 %v2113
    %v2116 = vpop.xlane.xlu0 %2115
    %2117 = vadd.xlane.f32.xlu0 %v2114
    %v2118 = vpop.xlane.xlu0 %2117
    %v2119 = vmul.f32 %v2116, %v1314
    %v2120 = vmul.f32 %v2118, %v1314
    %v2121 = vsub.f32 %v2113, %v2119
    %v2122 = vsub.f32 %v2114, %v2120
    %v2123 = vmul.f32 %v2121, %v2121
    %v2124 = vmul.f32 %v2122, %v2122
    %2125 = vadd.xlane.f32.xlu0 %v2123
    %v2126 = vpop.xlane.xlu0 %2125
    %2127 = vadd.xlane.f32.xlu0 %v2124
    %v2128 = vpop.xlane.xlu0 %2127
    %v2129 = vmul.f32 %v2126, %v1314
    %v2130 = vmul.f32 %v2128, %v1314
    %v2131 = vadd.f32 %v2129, 1e-12
    %v2132 = vadd.f32 %v2130, 1e-12
    %v2133 = vrsqrt.pop %v2131
    %v2134 = vrsqrt.pop %v2132
    %v2135 = vmul.f32 %v2121, %v2133
    %v2136 = vmul.f32 %v2122, %v2134
    %v2137 = vlaneseq
    %v2138 = vshrl.u32 %v2137, 7
    %v2139 = vsub.s32 5, %v2138
    %v2140 = vrot.slane %v169, %v2139
    %v2141 = vmul.f32 %v2135, %v2140
    %v2142 = vmul.f32 %v2136, %v2140
    %v2143 = vlaneseq
    %v2144 = vshrl.u32 %v2143, 7
    %v2145 = vsub.s32 6, %v2144
    %v2146 = vrot.slane %v169, %v2145
    %v2147 = vadd.f32 %v2141, %v2146
    %v2148 = vadd.f32 %v2142, %v2146
    %2149 = vst [vmem:[#allocation16] sm:$0xff] %v2147
    %2150 = vst [vmem:[#allocation16 + $0x8] sm:$0xff] %v2148
    // Predicated region
    $region78: #{tpu_custom_call.1} parent=1 // pred_check
      _
    $region79: #{tpu_custom_call.1} parent=1 // pred_check_branch
      %2152 = sbr.rel (0) target = $region81
    $region80: #{tpu_custom_call.1} parent=1 // pred_region
      %s2154 = ssub.s32 256, 256
      %2155 = vsyncadd [#allocation4], %s2154
      %s2156 = sshll.u32 [#allocation16], 4
      %s2157 = int_to_ptr.vmem [resolvable:$true] %s2156
      %2162 = dma.vmem_to_hbm [thread:$0]  %s2157, 256, %s11, [#allocation4], 128, 128, 8
    $region81: #{tpu_custom_call.1} parent=1 // pred_fallthru
      _
    // Predicated region
    $region82: #{tpu_custom_call.1} parent=1 // pred_check
      _
    $region83: #{tpu_custom_call.1} parent=1 // pred_check_branch
      %2164 = sbr.rel (0) target = $region85
    $region84: #{tpu_custom_call.1} parent=1 // pred_region
      %2165 = dma.done [#allocation4], 256
    $region85: #{tpu_custom_call.1} parent=1 // pred_fallthru
      _
    %2166 = vsyncpa [#allocation3], 1
    %2167 = vsyncpa [#allocation6], 1
    %2168 = vsyncpa [#allocation9], 1
    %2169 = vsyncpa [#allocation12], 1
    %2170 = vsyncpa [#allocation15], 1
    %2171 = vsyncpa [#allocation4], 1

</llo_original>
